<compile_context>
chip_gen: v7x
topology: tpu7x:2x2x1
jax: 0.10.0
libtpu: 0.0.40
codegen_flags: <defaults>
</compile_context>

<pallas_src>
import functools

import jax
import jax.numpy as jnp
from jax.experimental import pallas as pl
from jax.experimental.pallas import tpu as pltpu

EPS = 1e-5


# ----------------------------- fused kernel ---------------------------------

def _resnet3_kernel(x_ref, w0_ref, s0_ref, b0_ref, wb1_ref, wb2_ref,
                    sb_ref, bb_ref, wf_ref, sf_ref, bf_ref, o_ref,
                    *, H, W, p, d):
    HW = H * W
    m = max(p, d)                       # max dilation -> pad rows needed
    PAD = m * (W + 1)                   # covers m rows plus m cols of slack
    W2 = HW + 2 * m * W                 # extent actually read by the taps

    x = x_ref[0]                                            # (d0, HW) f32

    # --- initial_conv: 1x1 conv + BN + ReLU (f32, tiny K=d0) -----------------
    x1 = jnp.dot(w0_ref[...], x, preferred_element_type=jnp.float32)
    x1 = jnp.maximum(x1 * s0_ref[...] + b0_ref[...], 0.0)   # (d1, HW) f32

    # Single bf16 cast of x1; zero pad rows on both sides give correct zeros
    # for all vertically out-of-range taps (no masks needed for dy).
    x1b = x1.astype(jnp.bfloat16)
    zpad = jnp.zeros((x1b.shape[0], PAD), jnp.bfloat16)
    xb = jnp.concatenate([zpad, x1b, zpad], axis=1)          # (d1, HW + 2*PAD)

    # Horizontally shifted, column-masked views — one per distinct dx offset.
    # The mask only fixes the row-wrap of the flat layout (w + dx outside
    # [0, W)); it is shared by all 3 vertical taps that use this dx.
    col = jax.lax.broadcasted_iota(jnp.int32, (1, W2), 1) % W

    def shifted_view(dx):
        v = xb[:, m + dx: m + dx + W2]                       # (d1, W2) bf16
        if dx == 0:
            return v
        return jnp.where((col + dx >= 0) & (col + dx < W), v, 0.0)

    dx_vals = sorted({(k - 1) * dil for dil in (p, d) for k in range(3)})
    xdx = {dx: shifted_view(dx) for dx in dx_vals}

    # --- branch1 / branch2: dilated 3x3 conv as ONE im2col matmul each ------
    def branch(w_ref, dil):
        taps = []
        for ky in range(3):
            for kx in range(3):
                dy = (ky - 1) * dil
                dx = (kx - 1) * dil
                s = (m + dy) * W
                taps.append(xdx[dx][:, s:s + HW])            # pure lane shift
        xi = jnp.concatenate(taps, axis=0)                   # (9*d1, HW) bf16
        return jnp.dot(w_ref[...], xi,
                       preferred_element_type=jnp.float32)   # (cout, HW) f32

    cat = jnp.concatenate([branch(wb1_ref, p), branch(wb2_ref, d)], axis=0)
    cat = jnp.maximum(cat * sb_ref[...] + bb_ref[...], 0.0)  # (d3, HW) f32

    # --- final_conv (f32, tiny K=d3) + residual add + outer ReLU -------------
    up = jnp.dot(wf_ref[...], cat, preferred_element_type=jnp.float32)
    up = jnp.maximum(up * sf_ref[...] + bf_ref[...], 0.0)    # (d2, HW) f32
    o_ref[0] = jnp.maximum(up + x, 0.0).astype(o_ref.dtype)  # lane-dense store


# ----------------------------- wrapper ---------------------------------------

@functools.partial(jax.jit, static_argnames=("p", "d"))
def resnet3_forward(x_nchw, params, p, d):
    N, d0, H, W = x_nchw.shape
    HW = H * W
    d1 = params["w0t"].shape[0]
    d2 = params["wft"].shape[0]
    d3 = params["wft"].shape[1]
    assert d2 == d0, "residual add requires d2 == d0"

    # NCHW -> (N, C, H*W): free view, consumed directly (no pad, no transpose).
    x_flat = x_nchw.reshape(N, d0, HW)

    kern = functools.partial(_resnet3_kernel, H=H, W=W, p=p, d=d)
    const = lambda n: (0, 0)
    out = pl.pallas_call(
        kern,
        out_shape=jax.ShapeDtypeStruct((N, d2, HW), jnp.float32),
        grid_spec=pltpu.PrefetchScalarGridSpec(
            num_scalar_prefetch=0,
            grid=(N,),
            in_specs=[
                pl.BlockSpec((1, d0, HW), lambda n: (n, 0, 0)),
                pl.BlockSpec((d1, d0), const),
                pl.BlockSpec((d1, 1), const),
                pl.BlockSpec((d1, 1), const),
                pl.BlockSpec((d3 // 2, 9 * d1), const),
                pl.BlockSpec((d3 // 2, 9 * d1), const),
                pl.BlockSpec((d3, 1), const),
                pl.BlockSpec((d3, 1), const),
                pl.BlockSpec((d2, d3), const),
                pl.BlockSpec((d2, 1), const),
                pl.BlockSpec((d2, 1), const),
            ],
            out_specs=pl.BlockSpec((1, d2, HW), lambda n: (n, 0, 0))),
        compiler_params=pltpu.CompilerParams(
            dimension_semantics=("parallel",),
            vmem_limit_bytes=32 * 1024 * 1024),
    )(x_flat, params["w0t"], params["s0"], params["b0"],
      params["wb1"], params["wb2"], params["sb"], params["bb"],
      params["wft"], params["sf"], params["bf"])

    return out.reshape(N, d2, H, W)              # already NCHW


# ----------------------------- parameter packing -----------------------------

def fold_bn(bias, gamma, beta, mean, var):
    scale = gamma / jnp.sqrt(var + EPS)
    shift = beta + (bias - mean) * scale
    return scale.reshape(-1, 1), shift.reshape(-1, 1)   # (C, 1) column vectors


def pack_params(raw):
    s0, b0 = fold_bn(*raw["bn_init"])
    s1, b1 = fold_bn(*raw["bn_b1"])
    s2, b2 = fold_bn(*raw["bn_b2"])
    sf, bf = fold_bn(*raw["bn_fin"])
    d1 = raw["w_init"].shape[1]
    ch = raw["w_b1"].shape[-1]
    # (3,3,Cin,Cout) -> (Cout, 9*Cin) so row (ky*3+kx)*d1+ci of the im2col
    # stack matches.
    wb1 = raw["w_b1"].reshape(9 * d1, ch).T
    wb2 = raw["w_b2"].reshape(9 * d1, ch).T
    return dict(
        w0t=raw["w_init"].T.astype(jnp.float32),         # (d1, d0), f32 (tiny K)
        s0=s0, b0=b0,
        wb1=wb1.astype(jnp.bfloat16),                     # big-K matmuls in bf16
        wb2=wb2.astype(jnp.bfloat16),
        sb=jnp.concatenate([s1, s2], axis=0),
        bb=jnp.concatenate([b1, b2], axis=0),
        wft=raw["w_fin"].T.astype(jnp.float32),           # (d2, d3), f32 (tiny K)
        sf=sf, bf=bf)


# ----------------------------- reference (pure JAX, f32) ---------------------

def _conv_bn_relu_ref(x_nhwc, w_hwio, bias, gamma, beta, mean, var, *, dil=1, pad=0):
    y = jax.lax.conv_general_dilated(
        x_nhwc, w_hwio, window_strides=(1, 1),
        padding=[(pad, pad), (pad, pad)], rhs_dilation=(dil, dil),
        dimension_numbers=("NHWC", "HWIO", "NHWC"))
    y = y + bias
    y = (y - mean) / jnp.sqrt(var + EPS) * gamma + beta
    return jnp.maximum(y, 0.0)


def resnet3_ref(x_nchw, raw, p, d):
    x = jnp.transpose(x_nchw, (0, 2, 3, 1)).astype(jnp.float32)
    x1 = _conv_bn_relu_ref(x, raw["w_init"][None, None], *raw["bn_init"])
    o1 = _conv_bn_relu_ref(x1, raw["w_b1"], *raw["bn_b1"], dil=p, pad=p)
    o2 = _conv_bn_relu_ref(x1, raw["w_b2"], *raw["bn_b2"], dil=d, pad=d)
    cat = jnp.concatenate([o1, o2], axis=-1)
    up = _conv_bn_relu_ref(cat, raw["w_fin"][None, None], *raw["bn_fin"])
    out = jnp.maximum(up + x, 0.0)
    return jnp.transpose(out, (0, 3, 1, 2))


# ----------------------------- main ------------------------------------------

if __name__ == "__main__":
    # options = [d0, d1, d2, d3, p, d]; residual add requires d2 == d0
    d0, d1, d2, d3, p, d = 8, 16, 8, 16, 1, 2
    N, H, W = 2, 16, 16

    key = jax.random.PRNGKey(0)
    keys = iter(jax.random.split(key, 32))

    def make_bn(c):
        gamma = 1.0 + 0.1 * jax.random.normal(next(keys), (c,), jnp.float32)
        beta = 0.1 * jax.random.normal(next(keys), (c,), jnp.float32)
        mean = 0.1 * jax.random.normal(next(keys), (c,), jnp.float32)
        var = 0.5 + jax.random.uniform(next(keys), (c,), jnp.float32)
        return gamma, beta, mean, var

    def make_w(shape):
        return 0.1 * jax.random.normal(next(keys), shape, jnp.float32)

    raw = {
        "w_init": make_w((d0, d1)),            # 1x1 conv as (Cin, Cout)
        "bias_init": make_w((d1,)),
        "w_b1": make_w((3, 3, d1, d3 // 2)),   # HWIO
        "bias_b1": make_w((d3 // 2,)),
        "w_b2": make_w((3, 3, d1, d3 // 2)),
        "bias_b2": make_w((d3 // 2,)),
        "w_fin": make_w((d3, d2)),
        "bias_fin": make_w((d2,)),
    }
    raw["bn_init"] = (raw["bias_init"],) + make_bn(d1)
    raw["bn_b1"] = (raw["bias_b1"],) + make_bn(d3 // 2)
    raw["bn_b2"] = (raw["bias_b2"],) + make_bn(d3 // 2)
    raw["bn_fin"] = (raw["bias_fin"],) + make_bn(d2)

    params = pack_params(raw)
    x = jax.random.normal(next(keys), (N, d0, H, W), jnp.float32)  # NCHW input

    out = jax.block_until_ready(resnet3_forward(x, params, p, d))
    ref = jax.block_until_ready(resnet3_ref(x, raw, p, d))

    max_diff = float(jnp.max(jnp.abs(out - ref)))
    assert out.shape == (N, d2, H, W), out.shape
    # Only the two large-K branch matmuls run in bf16 (f32 accumulate); the
    # tiny-K 1x1 convs and all element-wise math are f32.
    assert max_diff < 5e-2, f"mismatch vs reference: {max_diff}"

    print("KERNEL_OK")
</pallas_src>

<mosaic_0001>
module attributes {stable_mosaic.version = 11 : i64} {
  func.func @_resnet3_kernel(%arg0: i32, %arg1: memref<1x8x256xf32, #tpu.memory_space<vmem>>, %arg2: memref<16x8xf32, #tpu.memory_space<vmem>>, %arg3: memref<16x1xf32, #tpu.memory_space<vmem>>, %arg4: memref<16x1xf32, #tpu.memory_space<vmem>>, %arg5: memref<8x144xbf16, #tpu.memory_space<vmem>>, %arg6: memref<8x144xbf16, #tpu.memory_space<vmem>>, %arg7: memref<16x1xf32, #tpu.memory_space<vmem>>, %arg8: memref<16x1xf32, #tpu.memory_space<vmem>>, %arg9: memref<8x16xf32, #tpu.memory_space<vmem>>, %arg10: memref<8x1xf32, #tpu.memory_space<vmem>>, %arg11: memref<8x1xf32, #tpu.memory_space<vmem>>, %arg12: memref<1x8x256xf32, #tpu.memory_space<vmem>>) attributes {dimension_semantics = [#tpu.dimension_semantics<parallel>], iteration_bounds = array<i64: 2>, scalar_prefetch = 0 : i64, scratch_operands = 0 : i64, tpu.core_type = #tpu.core_type<tc>, window_params = [{transform_indices = @transform_0, window_bounds = array<i64: 1, 8, 256>}, {pipeline_mode = #tpu.pipeline_mode<synchronous>, transform_indices = @transform_1, window_bounds = array<i64: 16, 8>}, {pipeline_mode = #tpu.pipeline_mode<synchronous>, transform_indices = @transform_2, window_bounds = array<i64: 16, 1>}, {pipeline_mode = #tpu.pipeline_mode<synchronous>, transform_indices = @transform_3, window_bounds = array<i64: 16, 1>}, {pipeline_mode = #tpu.pipeline_mode<synchronous>, transform_indices = @transform_4, window_bounds = array<i64: 8, 144>}, {pipeline_mode = #tpu.pipeline_mode<synchronous>, transform_indices = @transform_5, window_bounds = array<i64: 8, 144>}, {pipeline_mode = #tpu.pipeline_mode<synchronous>, transform_indices = @transform_6, window_bounds = array<i64: 16, 1>}, {pipeline_mode = #tpu.pipeline_mode<synchronous>, transform_indices = @transform_7, window_bounds = array<i64: 16, 1>}, {pipeline_mode = #tpu.pipeline_mode<synchronous>, transform_indices = @transform_8, window_bounds = array<i64: 8, 16>}, {pipeline_mode = #tpu.pipeline_mode<synchronous>, transform_indices = @transform_9, window_bounds = array<i64: 8, 1>}, {pipeline_mode = #tpu.pipeline_mode<synchronous>, transform_indices = @transform_10, window_bounds = array<i64: 8, 1>}, {transform_indices = @transform_11, window_bounds = array<i64: 1, 8, 256>}]} {
    %c0 = arith.constant 0 : index
    %c0_0 = arith.constant 0 : index
    %c0_1 = arith.constant 0 : index
    %0 = vector.load %arg1[%c0, %c0_0, %c0_1] : memref<1x8x256xf32, #tpu.memory_space<vmem>>, vector<1x8x256xf32>
    %1 = vector.shape_cast %0 : vector<1x8x256xf32> to vector<8x256xf32>
    %c0_2 = arith.constant 0 : index
    %c0_3 = arith.constant 0 : index
    %2 = vector.load %arg2[%c0_2, %c0_3] : memref<16x8xf32, #tpu.memory_space<vmem>>, vector<16x8xf32>
    %cst = arith.constant dense<0.000000e+00> : vector<16x256xf32>
    %3 = tpu.matmul %2, %1, %cst {dimension_numbers = #tpu.dot_dimension_numbers<[1], [0], [0], [1], [0, 0, 1, 1], [], []>} : vector<16x8xf32>, vector<8x256xf32>, vector<16x256xf32> -> vector<16x256xf32>
    %c0_4 = arith.constant 0 : index
    %c0_5 = arith.constant 0 : index
    %4 = vector.load %arg3[%c0_4, %c0_5] : memref<16x1xf32, #tpu.memory_space<vmem>>, vector<16x1xf32>
    %5 = vector.broadcast %4 : vector<16x1xf32> to vector<16x256xf32>
    %6 = arith.mulf %3, %5 : vector<16x256xf32>
    %c0_6 = arith.constant 0 : index
    %c0_7 = arith.constant 0 : index
    %7 = vector.load %arg4[%c0_6, %c0_7] : memref<16x1xf32, #tpu.memory_space<vmem>>, vector<16x1xf32>
    %8 = vector.broadcast %7 : vector<16x1xf32> to vector<16x256xf32>
    %9 = arith.addf %6, %8 : vector<16x256xf32>
    %cst_8 = arith.constant 0.000000e+00 : f32
    %10 = vector.broadcast %cst_8 : f32 to vector<16x256xf32>
    %11 = arith.maximumf %9, %10 : vector<16x256xf32>
    %12 = arith.truncf %11 : vector<16x256xf32> to vector<16x256xbf16>
    %cst_9 = arith.constant 0.000000e+00 : bf16
    %13 = vector.broadcast %cst_9 : bf16 to vector<16x34xbf16>
    %14 = tpu.concatenate %13, %12, %13 in 1 : vector<16x34xbf16>, vector<16x256xbf16>, vector<16x34xbf16> -> vector<16x324xbf16>
    %15 = tpu.iota {dimensions = array<i32: 1>} : vector<1x320xi32>
    %c16_i32 = arith.constant 16 : i32
    %c0_i32 = arith.constant 0 : i32
    %16 = arith.cmpi eq, %c16_i32, %c0_i32 : i32
    %c1_i32 = arith.constant 1 : i32
    %17 = arith.select %16, %c1_i32, %c16_i32 : i32
    %18 = vector.broadcast %17 : i32 to vector<1x320xi32>
    %19 = arith.remsi %15, %18 : vector<1x320xi32>
    %c0_i32_10 = arith.constant 0 : i32
    %20 = vector.broadcast %c0_i32_10 : i32 to vector<1x320xi32>
    %21 = arith.cmpi ne, %19, %20 : vector<1x320xi32>
    %c0_i32_11 = arith.constant 0 : i32
    %22 = vector.broadcast %c0_i32_11 : i32 to vector<1x320xi32>
    %23 = arith.cmpi slt, %19, %22 : vector<1x320xi32>
    %c0_i32_12 = arith.constant 0 : i32
    %24 = arith.cmpi slt, %17, %c0_i32_12 : i32
    %25 = vector.broadcast %24 : i1 to vector<1x320xi1>
    %26 = vector.broadcast %25 : vector<1x320xi1> to vector<1x320xi1>
    %27 = arith.xori %23, %26 : vector<1x320xi1>
    %28 = arith.andi %27, %21 : vector<1x320xi1>
    %29 = vector.broadcast %17 : i32 to vector<1x320xi32>
    %30 = arith.addi %19, %29 : vector<1x320xi32>
    %31 = arith.select %28, %30, %19 : vector<1x320xi1>, vector<1x320xi32>
    %32 = vector.extract_strided_slice %14 {offsets = [0, 0], sizes = [16, 320], strides = [1, 1]} : vector<16x324xbf16> to vector<16x320xbf16>
    %c-2_i32 = arith.constant -2 : i32
    %33 = vector.broadcast %c-2_i32 : i32 to vector<1x320xi32>
    %34 = arith.addi %31, %33 : vector<1x320xi32>
    %c0_i32_13 = arith.constant 0 : i32
    %35 = vector.broadcast %c0_i32_13 : i32 to vector<1x320xi32>
    %36 = arith.cmpi sge, %34, %35 : vector<1x320xi32>
    %c-2_i32_14 = arith.constant -2 : i32
    %37 = vector.broadcast %c-2_i32_14 : i32 to vector<1x320xi32>
    %38 = arith.addi %31, %37 : vector<1x320xi32>
    %c16_i32_15 = arith.constant 16 : i32
    %39 = vector.broadcast %c16_i32_15 : i32 to vector<1x320xi32>
    %40 = arith.cmpi slt, %38, %39 : vector<1x320xi32>
    %41 = arith.andi %36, %40 : vector<1x320xi1>
    %cst_16 = arith.constant 0.000000e+00 : f32
    %42 = arith.truncf %cst_16 : f32 to bf16
    %43 = vector.shape_cast %41 : vector<1x320xi1> to vector<1x320xi1>
    %44 = vector.broadcast %43 : vector<1x320xi1> to vector<16x320xi1>
    %45 = vector.broadcast %42 : bf16 to vector<16x320xbf16>
    %46 = arith.select %44, %32, %45 : vector<16x320xi1>, vector<16x320xbf16>
    %47 = vector.extract_strided_slice %14 {offsets = [0, 1], sizes = [16, 320], strides = [1, 1]} : vector<16x324xbf16> to vector<16x320xbf16>
    %c-1_i32 = arith.constant -1 : i32
    %48 = vector.broadcast %c-1_i32 : i32 to vector<1x320xi32>
    %49 = arith.addi %31, %48 : vector<1x320xi32>
    %c0_i32_17 = arith.constant 0 : i32
    %50 = vector.broadcast %c0_i32_17 : i32 to vector<1x320xi32>
    %51 = arith.cmpi sge, %49, %50 : vector<1x320xi32>
    %c-1_i32_18 = arith.constant -1 : i32
    %52 = vector.broadcast %c-1_i32_18 : i32 to vector<1x320xi32>
    %53 = arith.addi %31, %52 : vector<1x320xi32>
    %c16_i32_19 = arith.constant 16 : i32
    %54 = vector.broadcast %c16_i32_19 : i32 to vector<1x320xi32>
    %55 = arith.cmpi slt, %53, %54 : vector<1x320xi32>
    %56 = arith.andi %51, %55 : vector<1x320xi1>
    %cst_20 = arith.constant 0.000000e+00 : f32
    %57 = arith.truncf %cst_20 : f32 to bf16
    %58 = vector.shape_cast %56 : vector<1x320xi1> to vector<1x320xi1>
    %59 = vector.broadcast %58 : vector<1x320xi1> to vector<16x320xi1>
    %60 = vector.broadcast %57 : bf16 to vector<16x320xbf16>
    %61 = arith.select %59, %47, %60 : vector<16x320xi1>, vector<16x320xbf16>
    %62 = vector.extract_strided_slice %14 {offsets = [0, 2], sizes = [16, 320], strides = [1, 1]} : vector<16x324xbf16> to vector<16x320xbf16>
    %63 = vector.extract_strided_slice %14 {offsets = [0, 3], sizes = [16, 320], strides = [1, 1]} : vector<16x324xbf16> to vector<16x320xbf16>
    %c1_i32_21 = arith.constant 1 : i32
    %64 = vector.broadcast %c1_i32_21 : i32 to vector<1x320xi32>
    %65 = arith.addi %31, %64 : vector<1x320xi32>
    %c0_i32_22 = arith.constant 0 : i32
    %66 = vector.broadcast %c0_i32_22 : i32 to vector<1x320xi32>
    %67 = arith.cmpi sge, %65, %66 : vector<1x320xi32>
    %c1_i32_23 = arith.constant 1 : i32
    %68 = vector.broadcast %c1_i32_23 : i32 to vector<1x320xi32>
    %69 = arith.addi %31, %68 : vector<1x320xi32>
    %c16_i32_24 = arith.constant 16 : i32
    %70 = vector.broadcast %c16_i32_24 : i32 to vector<1x320xi32>
    %71 = arith.cmpi slt, %69, %70 : vector<1x320xi32>
    %72 = arith.andi %67, %71 : vector<1x320xi1>
    %cst_25 = arith.constant 0.000000e+00 : f32
    %73 = arith.truncf %cst_25 : f32 to bf16
    %74 = vector.shape_cast %72 : vector<1x320xi1> to vector<1x320xi1>
    %75 = vector.broadcast %74 : vector<1x320xi1> to vector<16x320xi1>
    %76 = vector.broadcast %73 : bf16 to vector<16x320xbf16>
    %77 = arith.select %75, %63, %76 : vector<16x320xi1>, vector<16x320xbf16>
    %78 = vector.extract_strided_slice %14 {offsets = [0, 4], sizes = [16, 320], strides = [1, 1]} : vector<16x324xbf16> to vector<16x320xbf16>
    %c2_i32 = arith.constant 2 : i32
    %79 = vector.broadcast %c2_i32 : i32 to vector<1x320xi32>
    %80 = arith.addi %31, %79 : vector<1x320xi32>
    %c0_i32_26 = arith.constant 0 : i32
    %81 = vector.broadcast %c0_i32_26 : i32 to vector<1x320xi32>
    %82 = arith.cmpi sge, %80, %81 : vector<1x320xi32>
    %c2_i32_27 = arith.constant 2 : i32
    %83 = vector.broadcast %c2_i32_27 : i32 to vector<1x320xi32>
    %84 = arith.addi %31, %83 : vector<1x320xi32>
    %c16_i32_28 = arith.constant 16 : i32
    %85 = vector.broadcast %c16_i32_28 : i32 to vector<1x320xi32>
    %86 = arith.cmpi slt, %84, %85 : vector<1x320xi32>
    %87 = arith.andi %82, %86 : vector<1x320xi1>
    %cst_29 = arith.constant 0.000000e+00 : f32
    %88 = arith.truncf %cst_29 : f32 to bf16
    %89 = vector.shape_cast %87 : vector<1x320xi1> to vector<1x320xi1>
    %90 = vector.broadcast %89 : vector<1x320xi1> to vector<16x320xi1>
    %91 = vector.broadcast %88 : bf16 to vector<16x320xbf16>
    %92 = arith.select %90, %78, %91 : vector<16x320xi1>, vector<16x320xbf16>
    %93 = vector.extract_strided_slice %61 {offsets = [0, 16], sizes = [16, 256], strides = [1, 1]} : vector<16x320xbf16> to vector<16x256xbf16>
    %94 = vector.extract_strided_slice %62 {offsets = [0, 16], sizes = [16, 256], strides = [1, 1]} : vector<16x320xbf16> to vector<16x256xbf16>
    %95 = vector.extract_strided_slice %77 {offsets = [0, 16], sizes = [16, 256], strides = [1, 1]} : vector<16x320xbf16> to vector<16x256xbf16>
    %96 = vector.extract_strided_slice %61 {offsets = [0, 32], sizes = [16, 256], strides = [1, 1]} : vector<16x320xbf16> to vector<16x256xbf16>
    %97 = vector.extract_strided_slice %62 {offsets = [0, 32], sizes = [16, 256], strides = [1, 1]} : vector<16x320xbf16> to vector<16x256xbf16>
    %98 = vector.extract_strided_slice %77 {offsets = [0, 32], sizes = [16, 256], strides = [1, 1]} : vector<16x320xbf16> to vector<16x256xbf16>
    %99 = vector.extract_strided_slice %61 {offsets = [0, 48], sizes = [16, 256], strides = [1, 1]} : vector<16x320xbf16> to vector<16x256xbf16>
    %100 = vector.extract_strided_slice %62 {offsets = [0, 48], sizes = [16, 256], strides = [1, 1]} : vector<16x320xbf16> to vector<16x256xbf16>
    %101 = vector.extract_strided_slice %77 {offsets = [0, 48], sizes = [16, 256], strides = [1, 1]} : vector<16x320xbf16> to vector<16x256xbf16>
    %102 = tpu.concatenate %93, %94, %95, %96, %97, %98, %99, %100, %101 in 0 : vector<16x256xbf16>, vector<16x256xbf16>, vector<16x256xbf16>, vector<16x256xbf16>, vector<16x256xbf16>, vector<16x256xbf16>, vector<16x256xbf16>, vector<16x256xbf16>, vector<16x256xbf16> -> vector<144x256xbf16>
    %c0_30 = arith.constant 0 : index
    %c0_31 = arith.constant 0 : index
    %103 = vector.load %arg5[%c0_30, %c0_31] : memref<8x144xbf16, #tpu.memory_space<vmem>>, vector<8x144xbf16>
    %cst_32 = arith.constant dense<0.000000e+00> : vector<8x256xf32>
    %104 = tpu.matmul %103, %102, %cst_32 {dimension_numbers = #tpu.dot_dimension_numbers<[1], [0], [0], [1], [0, 0, 1, 1], [], []>} : vector<8x144xbf16>, vector<144x256xbf16>, vector<8x256xf32> -> vector<8x256xf32>
    %105 = vector.extract_strided_slice %46 {offsets = [0, 0], sizes = [16, 256], strides = [1, 1]} : vector<16x320xbf16> to vector<16x256xbf16>
    %106 = vector.extract_strided_slice %62 {offsets = [0, 0], sizes = [16, 256], strides = [1, 1]} : vector<16x320xbf16> to vector<16x256xbf16>
    %107 = vector.extract_strided_slice %92 {offsets = [0, 0], sizes = [16, 256], strides = [1, 1]} : vector<16x320xbf16> to vector<16x256xbf16>
    %108 = vector.extract_strided_slice %46 {offsets = [0, 32], sizes = [16, 256], strides = [1, 1]} : vector<16x320xbf16> to vector<16x256xbf16>
    %109 = vector.extract_strided_slice %62 {offsets = [0, 32], sizes = [16, 256], strides = [1, 1]} : vector<16x320xbf16> to vector<16x256xbf16>
    %110 = vector.extract_strided_slice %92 {offsets = [0, 32], sizes = [16, 256], strides = [1, 1]} : vector<16x320xbf16> to vector<16x256xbf16>
    %111 = vector.extract_strided_slice %46 {offsets = [0, 64], sizes = [16, 256], strides = [1, 1]} : vector<16x320xbf16> to vector<16x256xbf16>
    %112 = vector.extract_strided_slice %62 {offsets = [0, 64], sizes = [16, 256], strides = [1, 1]} : vector<16x320xbf16> to vector<16x256xbf16>
    %113 = vector.extract_strided_slice %92 {offsets = [0, 64], sizes = [16, 256], strides = [1, 1]} : vector<16x320xbf16> to vector<16x256xbf16>
    %114 = tpu.concatenate %105, %106, %107, %108, %109, %110, %111, %112, %113 in 0 : vector<16x256xbf16>, vector<16x256xbf16>, vector<16x256xbf16>, vector<16x256xbf16>, vector<16x256xbf16>, vector<16x256xbf16>, vector<16x256xbf16>, vector<16x256xbf16>, vector<16x256xbf16> -> vector<144x256xbf16>
    %c0_33 = arith.constant 0 : index
    %c0_34 = arith.constant 0 : index
    %115 = vector.load %arg6[%c0_33, %c0_34] : memref<8x144xbf16, #tpu.memory_space<vmem>>, vector<8x144xbf16>
    %cst_35 = arith.constant dense<0.000000e+00> : vector<8x256xf32>
    %116 = tpu.matmul %115, %114, %cst_35 {dimension_numbers = #tpu.dot_dimension_numbers<[1], [0], [0], [1], [0, 0, 1, 1], [], []>} : vector<8x144xbf16>, vector<144x256xbf16>, vector<8x256xf32> -> vector<8x256xf32>
    %117 = tpu.concatenate %104, %116 in 0 : vector<8x256xf32>, vector<8x256xf32> -> vector<16x256xf32>
    %c0_36 = arith.constant 0 : index
    %c0_37 = arith.constant 0 : index
    %118 = vector.load %arg7[%c0_36, %c0_37] : memref<16x1xf32, #tpu.memory_space<vmem>>, vector<16x1xf32>
    %119 = vector.broadcast %118 : vector<16x1xf32> to vector<16x256xf32>
    %120 = arith.mulf %117, %119 : vector<16x256xf32>
    %c0_38 = arith.constant 0 : index
    %c0_39 = arith.constant 0 : index
    %121 = vector.load %arg8[%c0_38, %c0_39] : memref<16x1xf32, #tpu.memory_space<vmem>>, vector<16x1xf32>
    %122 = vector.broadcast %121 : vector<16x1xf32> to vector<16x256xf32>
    %123 = arith.addf %120, %122 : vector<16x256xf32>
    %cst_40 = arith.constant 0.000000e+00 : f32
    %124 = vector.broadcast %cst_40 : f32 to vector<16x256xf32>
    %125 = arith.maximumf %123, %124 : vector<16x256xf32>
    %c0_41 = arith.constant 0 : index
    %c0_42 = arith.constant 0 : index
    %126 = vector.load %arg9[%c0_41, %c0_42] : memref<8x16xf32, #tpu.memory_space<vmem>>, vector<8x16xf32>
    %cst_43 = arith.constant dense<0.000000e+00> : vector<8x256xf32>
    %127 = tpu.matmul %126, %125, %cst_43 {dimension_numbers = #tpu.dot_dimension_numbers<[1], [0], [0], [1], [0, 0, 1, 1], [], []>} : vector<8x16xf32>, vector<16x256xf32>, vector<8x256xf32> -> vector<8x256xf32>
    %c0_44 = arith.constant 0 : index
    %c0_45 = arith.constant 0 : index
    %128 = vector.load %arg10[%c0_44, %c0_45] : memref<8x1xf32, #tpu.memory_space<vmem>>, vector<8x1xf32>
    %129 = vector.broadcast %128 : vector<8x1xf32> to vector<8x256xf32>
    %130 = arith.mulf %127, %129 : vector<8x256xf32>
    %c0_46 = arith.constant 0 : index
    %c0_47 = arith.constant 0 : index
    %131 = vector.load %arg11[%c0_46, %c0_47] : memref<8x1xf32, #tpu.memory_space<vmem>>, vector<8x1xf32>
    %132 = vector.broadcast %131 : vector<8x1xf32> to vector<8x256xf32>
    %133 = arith.addf %130, %132 : vector<8x256xf32>
    %cst_48 = arith.constant 0.000000e+00 : f32
    %134 = vector.broadcast %cst_48 : f32 to vector<8x256xf32>
    %135 = arith.maximumf %133, %134 : vector<8x256xf32>
    %136 = arith.addf %135, %1 : vector<8x256xf32>
    %cst_49 = arith.constant 0.000000e+00 : f32
    %137 = vector.broadcast %cst_49 : f32 to vector<8x256xf32>
    %138 = arith.maximumf %136, %137 : vector<8x256xf32>
    %c0_50 = arith.constant 0 : index
    %c0_51 = arith.constant 0 : index
    %c0_52 = arith.constant 0 : index
    %139 = vector.load %arg12[%c0_50, %c0_51, %c0_52] : memref<1x8x256xf32, #tpu.memory_space<vmem>>, vector<1x8x256xf32>
    %140 = vector.shape_cast %139 : vector<1x8x256xf32> to vector<8x256xf32>
    %141 = vector.shape_cast %138 : vector<8x256xf32> to vector<1x8x256xf32>
    tpu.vector_store %arg12[%c0_50, %c0_51, %c0_52], %141 {strides = array<i32>} : memref<1x8x256xf32, #tpu.memory_space<vmem>>, vector<1x8x256xf32>,
    return
  }
  func.func @transform_0(%arg0: i32) -> (i32, i32, i32) {
    %c0_i32 = arith.constant 0 : i32
    %c0_i32_0 = arith.constant 0 : i32
    %c0_i32_1 = arith.constant 0 : i32
    return %arg0, %c0_i32, %c0_i32_0 : i32, i32, i32
  }
  func.func @transform_1(%arg0: i32) -> (i32, i32) {
    %c0_i32 = arith.constant 0 : i32
    %c0_i32_0 = arith.constant 0 : i32
    %c0_i32_1 = arith.constant 0 : i32
    return %c0_i32, %c0_i32_0 : i32, i32
  }
  func.func @transform_2(%arg0: i32) -> (i32, i32) {
    %c0_i32 = arith.constant 0 : i32
    %c0_i32_0 = arith.constant 0 : i32
    %c0_i32_1 = arith.constant 0 : i32
    return %c0_i32, %c0_i32_0 : i32, i32
  }
  func.func @transform_3(%arg0: i32) -> (i32, i32) {
    %c0_i32 = arith.constant 0 : i32
    %c0_i32_0 = arith.constant 0 : i32
    %c0_i32_1 = arith.constant 0 : i32
    return %c0_i32, %c0_i32_0 : i32, i32
  }
  func.func @transform_4(%arg0: i32) -> (i32, i32) {
    %c0_i32 = arith.constant 0 : i32
    %c0_i32_0 = arith.constant 0 : i32
    %c0_i32_1 = arith.constant 0 : i32
    return %c0_i32, %c0_i32_0 : i32, i32
  }
  func.func @transform_5(%arg0: i32) -> (i32, i32) {
    %c0_i32 = arith.constant 0 : i32
    %c0_i32_0 = arith.constant 0 : i32
    %c0_i32_1 = arith.constant 0 : i32
    return %c0_i32, %c0_i32_0 : i32, i32
  }
  func.func @transform_6(%arg0: i32) -> (i32, i32) {
    %c0_i32 = arith.constant 0 : i32
    %c0_i32_0 = arith.constant 0 : i32
    %c0_i32_1 = arith.constant 0 : i32
    return %c0_i32, %c0_i32_0 : i32, i32
  }
  func.func @transform_7(%arg0: i32) -> (i32, i32) {
    %c0_i32 = arith.constant 0 : i32
    %c0_i32_0 = arith.constant 0 : i32
    %c0_i32_1 = arith.constant 0 : i32
    return %c0_i32, %c0_i32_0 : i32, i32
  }
  func.func @transform_8(%arg0: i32) -> (i32, i32) {
    %c0_i32 = arith.constant 0 : i32
    %c0_i32_0 = arith.constant 0 : i32
    %c0_i32_1 = arith.constant 0 : i32
    return %c0_i32, %c0_i32_0 : i32, i32
  }
  func.func @transform_9(%arg0: i32) -> (i32, i32) {
    %c0_i32 = arith.constant 0 : i32
    %c0_i32_0 = arith.constant 0 : i32
    %c0_i32_1 = arith.constant 0 : i32
    return %c0_i32, %c0_i32_0 : i32, i32
  }
  func.func @transform_10(%arg0: i32) -> (i32, i32) {
    %c0_i32 = arith.constant 0 : i32
    %c0_i32_0 = arith.constant 0 : i32
    %c0_i32_1 = arith.constant 0 : i32
    return %c0_i32, %c0_i32_0 : i32, i32
  }
  func.func @transform_11(%arg0: i32) -> (i32, i32, i32) {
    %c0_i32 = arith.constant 0 : i32
    %c0_i32_0 = arith.constant 0 : i32
    %c0_i32_1 = arith.constant 0 : i32
    return %arg0, %c0_i32, %c0_i32_0 : i32, i32, i32
  }
}

</mosaic_0001>

<llo_original>
// kernel: resnet3_forward.1
$region0: #{resnet3_forward.1}
  #allocation0 [shape = 'u32[]', space=smem, size = 0x4, offset = 0x4, fixed_abs, tag = 'smem constant byte address 0x4 - core index']
  #allocation1 [shape = 'u32[144,128]{1,0:T(1,128)}', space=vmem, size = 0x12000, scoped, tag = 'internal scratch']
  %s0 = inlined_call_operand.vmem [shape: f32[2,8,256], index: 0, kind: input, shape index: {}]
  %s1 = inlined_call_operand.vmem [shape: f32[16,8], index: 1, kind: input, shape index: {}]
  %s2 = inlined_call_operand.vmem [shape: f32[16,1], index: 2, kind: input, shape index: {}]
  %s3 = inlined_call_operand.vmem [shape: f32[16,1], index: 3, kind: input, shape index: {}]
  %s4 = inlined_call_operand.vmem [shape: bf16[8,144], index: 4, kind: input, shape index: {}]
  %s5 = inlined_call_operand.vmem [shape: bf16[8,144], index: 5, kind: input, shape index: {}]
  %s6 = inlined_call_operand.vmem [shape: f32[16,1], index: 6, kind: input, shape index: {}]
  %s7 = inlined_call_operand.vmem [shape: f32[16,1], index: 7, kind: input, shape index: {}]
  %s8 = inlined_call_operand.vmem [shape: f32[8,16], index: 8, kind: input, shape index: {}]
  %s9 = inlined_call_operand.vmem [shape: f32[8,1], index: 9, kind: input, shape index: {}]
  %s10 = inlined_call_operand.vmem [shape: f32[8,1], index: 10, kind: input, shape index: {}]
  %s11 = inlined_call_operand.vmem [shape: f32[2,8,256], index: 11, kind: output, shape index: {}]
  %s12 = sld [smem:[#allocation0]]
  $region77: #{resnet3_forward.1} parent=0
    _
  %s14 = ssub.s32 1, %s12
  %s15 = scalar_select 0, %s14, %s12
  loop: start=0, step=1, limit=4
  $region2: #{resnet3_forward.1} parent=0 // loop_pre_header
    _
  $region3: #{resnet3_forward.1} parent=0 // loop_header
    %s17 = sphi 0, %s21
    %p18 = scmp.ge.s32.totalorder %s17, 4
    %s27 = sphi 0, %s29
    %s30 = sphi 0, %s27
    %s31 = sphi 0, %s30
    %s47 = sphi 0, %s31
    %s51 = sphi 0, %s51
    %s53 = sphi 0, %s51
    %s54 = sphi 0, %s53
    %s68 = sphi 0, %s54
    %s72 = sphi 0, %s72
    %s74 = sphi 0, %s72
    %s75 = sphi 0, %s74
    %s89 = sphi 0, %s75
    %s93 = sphi 0, %s93
    %s95 = sphi 0, %s93
    %s96 = sphi 0, %s95
    %s110 = sphi 0, %s96
    %s114 = sphi 0, %s114
    %s116 = sphi 0, %s114
    %s117 = sphi 0, %s116
    %s131 = sphi 0, %s117
    %s135 = sphi 0, %s135
    %s137 = sphi 0, %s135
    %s138 = sphi 0, %s137
    %s152 = sphi 0, %s138
    %s156 = sphi 0, %s156
    %s158 = sphi 0, %s156
    %s159 = sphi 0, %s158
    %s173 = sphi 0, %s159
    %s177 = sphi 0, %s177
    %s179 = sphi 0, %s177
    %s180 = sphi 0, %s179
    %s194 = sphi 0, %s180
    %s198 = sphi 0, %s198
    %s200 = sphi 0, %s198
    %s201 = sphi 0, %s200
    %s215 = sphi 0, %s201
    %s219 = sphi 0, %s219
    %s221 = sphi 0, %s219
    %s222 = sphi 0, %s221
    %s236 = sphi 0, %s222
    %s240 = sphi 0, %s240
    %s242 = sphi 0, %s240
    %s243 = sphi 0, %s242
    %s257 = sphi 0, %s243
    %s263 = sphi 0, %s265
    %s266 = sphi 0, %s263
    %s267 = sphi 0, %s266
    %s283 = sphi 0, %s267
  $region4: #{resnet3_forward.1} parent=0 // loop_header_branch
    %20 = sbr.rel (%p18) target = $region8
  $region5: #{resnet3_forward.1} parent=0 // loop_body
    %s22 = ssub.s32 %s17, 1
    %s23 = ssub.s32 %s17, 2
    %s24 = sadd.s32 %s17, 1
    %s25 = ssub.s32 %s17, %s24
    %p26 = scmp.eq.s32.totalorder %s25, 0
    %s28 = sadd.s32 %s27, 1
    %s29 = scalar_select %p26, %s27, %s28
    %p32 = pneg %p26
    %p33 = scmp.eq.s32.totalorder %s17, 1
    %p34 = por %p32, %p33
    %p35 = scmp.ne.s32.totalorder %s27, %s30
    %p36 = scmp.eq.s32.totalorder %s17, 0
    %p37 = por %p35, %p36
    %p38 = scmp.ne.s32.totalorder %s27, %s30
    %p39 = scmp.eq.s32.totalorder %s22, 1
    %p40 = por %p38, %p39
    %p41 = scmp.ne.s32.totalorder %s30, %s31
    %p42 = scmp.eq.s32.totalorder %s22, 0
    %p43 = por %p41, %p42
    %p44 = scmp.ne.s32.totalorder %s30, %s31
    %p45 = scmp.eq.s32.totalorder %s23, 1
    %p46 = por %p44, %p45
    %p48 = scmp.ne.s32.totalorder %s31, %s47
    %p49 = scmp.eq.s32.totalorder %s23, 0
    %p50 = por %p48, %p49
    %s52 = sadd.s32 %s51, 1
    %p55 = scmp.eq.s32.totalorder %s17, 1
    %p56 = scmp.ne.s32.totalorder %s51, %s53
    %p57 = scmp.eq.s32.totalorder %s17, 0
    %p58 = por %p56, %p57
    %p59 = scmp.ne.s32.totalorder %s51, %s53
    %p60 = scmp.eq.s32.totalorder %s22, 1
    %p61 = por %p59, %p60
    %p62 = scmp.ne.s32.totalorder %s53, %s54
    %p63 = scmp.eq.s32.totalorder %s22, 0
    %p64 = por %p62, %p63
    %p65 = scmp.ne.s32.totalorder %s53, %s54
    %p66 = scmp.eq.s32.totalorder %s23, 1
    %p67 = por %p65, %p66
    %p69 = scmp.ne.s32.totalorder %s54, %s68
    %p70 = scmp.eq.s32.totalorder %s23, 0
    %p71 = por %p69, %p70
    %s73 = sadd.s32 %s72, 1
    %p76 = scmp.eq.s32.totalorder %s17, 1
    %p77 = scmp.ne.s32.totalorder %s72, %s74
    %p78 = scmp.eq.s32.totalorder %s17, 0
    %p79 = por %p77, %p78
    %p80 = scmp.ne.s32.totalorder %s72, %s74
    %p81 = scmp.eq.s32.totalorder %s22, 1
    %p82 = por %p80, %p81
    %p83 = scmp.ne.s32.totalorder %s74, %s75
    %p84 = scmp.eq.s32.totalorder %s22, 0
    %p85 = por %p83, %p84
    %p86 = scmp.ne.s32.totalorder %s74, %s75
    %p87 = scmp.eq.s32.totalorder %s23, 1
    %p88 = por %p86, %p87
    %p90 = scmp.ne.s32.totalorder %s75, %s89
    %p91 = scmp.eq.s32.totalorder %s23, 0
    %p92 = por %p90, %p91
    %s94 = sadd.s32 %s93, 1
    %p97 = scmp.eq.s32.totalorder %s17, 1
    %p98 = scmp.ne.s32.totalorder %s93, %s95
    %p99 = scmp.eq.s32.totalorder %s17, 0
    %p100 = por %p98, %p99
    %p101 = scmp.ne.s32.totalorder %s93, %s95
    %p102 = scmp.eq.s32.totalorder %s22, 1
    %p103 = por %p101, %p102
    %p104 = scmp.ne.s32.totalorder %s95, %s96
    %p105 = scmp.eq.s32.totalorder %s22, 0
    %p106 = por %p104, %p105
    %p107 = scmp.ne.s32.totalorder %s95, %s96
    %p108 = scmp.eq.s32.totalorder %s23, 1
    %p109 = por %p107, %p108
    %p111 = scmp.ne.s32.totalorder %s96, %s110
    %p112 = scmp.eq.s32.totalorder %s23, 0
    %p113 = por %p111, %p112
    %s115 = sadd.s32 %s114, 1
    %p118 = scmp.eq.s32.totalorder %s17, 1
    %p119 = scmp.ne.s32.totalorder %s114, %s116
    %p120 = scmp.eq.s32.totalorder %s17, 0
    %p121 = por %p119, %p120
    %p122 = scmp.ne.s32.totalorder %s114, %s116
    %p123 = scmp.eq.s32.totalorder %s22, 1
    %p124 = por %p122, %p123
    %p125 = scmp.ne.s32.totalorder %s116, %s117
    %p126 = scmp.eq.s32.totalorder %s22, 0
    %p127 = por %p125, %p126
    %p128 = scmp.ne.s32.totalorder %s116, %s117
    %p129 = scmp.eq.s32.totalorder %s23, 1
    %p130 = por %p128, %p129
    %p132 = scmp.ne.s32.totalorder %s117, %s131
    %p133 = scmp.eq.s32.totalorder %s23, 0
    %p134 = por %p132, %p133
    %s136 = sadd.s32 %s135, 1
    %p139 = scmp.eq.s32.totalorder %s17, 1
    %p140 = scmp.ne.s32.totalorder %s135, %s137
    %p141 = scmp.eq.s32.totalorder %s17, 0
    %p142 = por %p140, %p141
    %p143 = scmp.ne.s32.totalorder %s135, %s137
    %p144 = scmp.eq.s32.totalorder %s22, 1
    %p145 = por %p143, %p144
    %p146 = scmp.ne.s32.totalorder %s137, %s138
    %p147 = scmp.eq.s32.totalorder %s22, 0
    %p148 = por %p146, %p147
    %p149 = scmp.ne.s32.totalorder %s137, %s138
    %p150 = scmp.eq.s32.totalorder %s23, 1
    %p151 = por %p149, %p150
    %p153 = scmp.ne.s32.totalorder %s138, %s152
    %p154 = scmp.eq.s32.totalorder %s23, 0
    %p155 = por %p153, %p154
    %s157 = sadd.s32 %s156, 1
    %p160 = scmp.eq.s32.totalorder %s17, 1
    %p161 = scmp.ne.s32.totalorder %s156, %s158
    %p162 = scmp.eq.s32.totalorder %s17, 0
    %p163 = por %p161, %p162
    %p164 = scmp.ne.s32.totalorder %s156, %s158
    %p165 = scmp.eq.s32.totalorder %s22, 1
    %p166 = por %p164, %p165
    %p167 = scmp.ne.s32.totalorder %s158, %s159
    %p168 = scmp.eq.s32.totalorder %s22, 0
    %p169 = por %p167, %p168
    %p170 = scmp.ne.s32.totalorder %s158, %s159
    %p171 = scmp.eq.s32.totalorder %s23, 1
    %p172 = por %p170, %p171
    %p174 = scmp.ne.s32.totalorder %s159, %s173
    %p175 = scmp.eq.s32.totalorder %s23, 0
    %p176 = por %p174, %p175
    %s178 = sadd.s32 %s177, 1
    %p181 = scmp.eq.s32.totalorder %s17, 1
    %p182 = scmp.ne.s32.totalorder %s177, %s179
    %p183 = scmp.eq.s32.totalorder %s17, 0
    %p184 = por %p182, %p183
    %p185 = scmp.ne.s32.totalorder %s177, %s179
    %p186 = scmp.eq.s32.totalorder %s22, 1
    %p187 = por %p185, %p186
    %p188 = scmp.ne.s32.totalorder %s179, %s180
    %p189 = scmp.eq.s32.totalorder %s22, 0
    %p190 = por %p188, %p189
    %p191 = scmp.ne.s32.totalorder %s179, %s180
    %p192 = scmp.eq.s32.totalorder %s23, 1
    %p193 = por %p191, %p192
    %p195 = scmp.ne.s32.totalorder %s180, %s194
    %p196 = scmp.eq.s32.totalorder %s23, 0
    %p197 = por %p195, %p196
    %s199 = sadd.s32 %s198, 1
    %p202 = scmp.eq.s32.totalorder %s17, 1
    %p203 = scmp.ne.s32.totalorder %s198, %s200
    %p204 = scmp.eq.s32.totalorder %s17, 0
    %p205 = por %p203, %p204
    %p206 = scmp.ne.s32.totalorder %s198, %s200
    %p207 = scmp.eq.s32.totalorder %s22, 1
    %p208 = por %p206, %p207
    %p209 = scmp.ne.s32.totalorder %s200, %s201
    %p210 = scmp.eq.s32.totalorder %s22, 0
    %p211 = por %p209, %p210
    %p212 = scmp.ne.s32.totalorder %s200, %s201
    %p213 = scmp.eq.s32.totalorder %s23, 1
    %p214 = por %p212, %p213
    %p216 = scmp.ne.s32.totalorder %s201, %s215
    %p217 = scmp.eq.s32.totalorder %s23, 0
    %p218 = por %p216, %p217
    %s220 = sadd.s32 %s219, 1
    %p223 = scmp.eq.s32.totalorder %s17, 1
    %p224 = scmp.ne.s32.totalorder %s219, %s221
    %p225 = scmp.eq.s32.totalorder %s17, 0
    %p226 = por %p224, %p225
    %p227 = scmp.ne.s32.totalorder %s219, %s221
    %p228 = scmp.eq.s32.totalorder %s22, 1
    %p229 = por %p227, %p228
    %p230 = scmp.ne.s32.totalorder %s221, %s222
    %p231 = scmp.eq.s32.totalorder %s22, 0
    %p232 = por %p230, %p231
    %p233 = scmp.ne.s32.totalorder %s221, %s222
    %p234 = scmp.eq.s32.totalorder %s23, 1
    %p235 = por %p233, %p234
    %p237 = scmp.ne.s32.totalorder %s222, %s236
    %p238 = scmp.eq.s32.totalorder %s23, 0
    %p239 = por %p237, %p238
    %s241 = sadd.s32 %s240, 1
    %p244 = scmp.eq.s32.totalorder %s17, 1
    %p245 = scmp.ne.s32.totalorder %s240, %s242
    %p246 = scmp.eq.s32.totalorder %s17, 0
    %p247 = por %p245, %p246
    %p248 = scmp.ne.s32.totalorder %s240, %s242
    %p249 = scmp.eq.s32.totalorder %s22, 1
    %p250 = por %p248, %p249
    %p251 = scmp.ne.s32.totalorder %s242, %s243
    %p252 = scmp.eq.s32.totalorder %s22, 0
    %p253 = por %p251, %p252
    %p254 = scmp.ne.s32.totalorder %s242, %s243
    %p255 = scmp.eq.s32.totalorder %s23, 1
    %p256 = por %p254, %p255
    %p258 = scmp.ne.s32.totalorder %s243, %s257
    %p259 = scmp.eq.s32.totalorder %s23, 0
    %p260 = por %p258, %p259
    %s261 = ssub.s32 %s17, %s24
    %p262 = scmp.eq.s32.totalorder %s261, 0
    %s264 = sadd.s32 %s263, 1
    %s265 = scalar_select %p262, %s263, %s264
    %p268 = pneg %p262
    %p269 = scmp.eq.s32.totalorder %s17, 1
    %p270 = por %p268, %p269
    %p271 = scmp.ne.s32.totalorder %s263, %s266
    %p272 = scmp.eq.s32.totalorder %s17, 0
    %p273 = por %p271, %p272
    %p274 = scmp.ne.s32.totalorder %s263, %s266
    %p275 = scmp.eq.s32.totalorder %s22, 1
    %p276 = por %p274, %p275
    %p277 = scmp.ne.s32.totalorder %s266, %s267
    %p278 = scmp.eq.s32.totalorder %s22, 0
    %p279 = por %p277, %p278
    %p280 = scmp.ne.s32.totalorder %s266, %s267
    %p281 = scmp.eq.s32.totalorder %s23, 1
    %p282 = por %p280, %p281
    %p284 = scmp.ne.s32.totalorder %s267, %s283
    %p285 = scmp.eq.s32.totalorder %s23, 0
    %p286 = por %p284, %p285
    %p287 = scmp.le.s32.totalorder 1, %s17
    %p288 = scmp.lt.s32.totalorder %s17, 3
    %p289 = pnand %p287, %p288
    %p290 = pneg %p289
    // Predicated region
    $region9: #{resnet3_forward.1} parent=5 // pred_check
      _
    $region10: #{resnet3_forward.1} parent=5 // pred_check_branch
      %292 = sbr.rel (%p289) target = $region12
    $region11: #{resnet3_forward.1} parent=5 // pred_region
      %s293 = ssub.s32 %s17, 1
      // Predicated region
      $region13: #{resnet3_forward.1} parent=11 // pred_check
        %p294 = pneg %p64
      $region14: #{resnet3_forward.1} parent=11 // pred_check_branch
        %296 = sbr.rel (%p294) target = $region16
      $region15: #{resnet3_forward.1} parent=11 // pred_region
        _
      $region16: #{resnet3_forward.1} parent=11 // pred_fallthru
        _
      // Predicated region
      $region17: #{resnet3_forward.1} parent=11 // pred_check
        %p297 = pneg %p85
      $region18: #{resnet3_forward.1} parent=11 // pred_check_branch
        %299 = sbr.rel (%p297) target = $region20
      $region19: #{resnet3_forward.1} parent=11 // pred_region
        _
      $region20: #{resnet3_forward.1} parent=11 // pred_fallthru
        _
      // Predicated region
      $region21: #{resnet3_forward.1} parent=11 // pred_check
        %p300 = pneg %p106
      $region22: #{resnet3_forward.1} parent=11 // pred_check_branch
        %302 = sbr.rel (%p300) target = $region24
      $region23: #{resnet3_forward.1} parent=11 // pred_region
        _
      $region24: #{resnet3_forward.1} parent=11 // pred_fallthru
        _
      // Predicated region
      $region25: #{resnet3_forward.1} parent=11 // pred_check
        %p303 = pneg %p127
      $region26: #{resnet3_forward.1} parent=11 // pred_check_branch
        %305 = sbr.rel (%p303) target = $region28
      $region27: #{resnet3_forward.1} parent=11 // pred_region
        _
      $region28: #{resnet3_forward.1} parent=11 // pred_fallthru
        _
      // Predicated region
      $region29: #{resnet3_forward.1} parent=11 // pred_check
        %p306 = pneg %p148
      $region30: #{resnet3_forward.1} parent=11 // pred_check_branch
        %308 = sbr.rel (%p306) target = $region32
      $region31: #{resnet3_forward.1} parent=11 // pred_region
        _
      $region32: #{resnet3_forward.1} parent=11 // pred_fallthru
        _
      // Predicated region
      $region33: #{resnet3_forward.1} parent=11 // pred_check
        %p309 = pneg %p169
      $region34: #{resnet3_forward.1} parent=11 // pred_check_branch
        %311 = sbr.rel (%p309) target = $region36
      $region35: #{resnet3_forward.1} parent=11 // pred_region
        _
      $region36: #{resnet3_forward.1} parent=11 // pred_fallthru
        _
      // Predicated region
      $region37: #{resnet3_forward.1} parent=11 // pred_check
        %p312 = pneg %p190
      $region38: #{resnet3_forward.1} parent=11 // pred_check_branch
        %314 = sbr.rel (%p312) target = $region40
      $region39: #{resnet3_forward.1} parent=11 // pred_region
        _
      $region40: #{resnet3_forward.1} parent=11 // pred_fallthru
        _
      // Predicated region
      $region41: #{resnet3_forward.1} parent=11 // pred_check
        %p315 = pneg %p211
      $region42: #{resnet3_forward.1} parent=11 // pred_check_branch
        %317 = sbr.rel (%p315) target = $region44
      $region43: #{resnet3_forward.1} parent=11 // pred_region
        _
      $region44: #{resnet3_forward.1} parent=11 // pred_fallthru
        _
      // Predicated region
      $region45: #{resnet3_forward.1} parent=11 // pred_check
        %p318 = pneg %p232
      $region46: #{resnet3_forward.1} parent=11 // pred_check_branch
        %320 = sbr.rel (%p318) target = $region48
      $region47: #{resnet3_forward.1} parent=11 // pred_region
        _
      $region48: #{resnet3_forward.1} parent=11 // pred_fallthru
        _
      // Predicated region
      $region49: #{resnet3_forward.1} parent=11 // pred_check
        %p321 = pneg %p253
      $region50: #{resnet3_forward.1} parent=11 // pred_check_branch
        %323 = sbr.rel (%p321) target = $region52
      $region51: #{resnet3_forward.1} parent=11 // pred_region
        _
      $region52: #{resnet3_forward.1} parent=11 // pred_fallthru
        _
    $region12: #{resnet3_forward.1} parent=5 // pred_fallthru
      _
    %p324 = scmp.lt.s32.totalorder %s17, 2
    // Predicated region
    $region53: #{resnet3_forward.1} parent=5 // pred_check
      %p325 = pneg %p324
    $region54: #{resnet3_forward.1} parent=5 // pred_check_branch
      %327 = sbr.rel (%p325) target = $region56
    $region55: #{resnet3_forward.1} parent=5 // pred_region
      // Predicated region
      $region57: #{resnet3_forward.1} parent=55 // pred_check
        %p328 = pneg %p37
      $region58: #{resnet3_forward.1} parent=55 // pred_check_branch
        %330 = sbr.rel (%p328) target = $region60
      $region59: #{resnet3_forward.1} parent=55 // pred_region
        %p331 = scmp.lt.s32.totalorder %s17, 1
        %s332 = scalar_select %p331, %s17, 1
        %s333 = smul.addr %s332, 2
        %s334 = smul.addr %s333, 8
        %s335 = scalar_lea.vmem %s0, %s334
      $region60: #{resnet3_forward.1} parent=55 // pred_fallthru
        _
    $region56: #{resnet3_forward.1} parent=5 // pred_fallthru
      _
    %p336 = scmp.le.s32.totalorder 1, %s17
    %p337 = scmp.lt.s32.totalorder %s17, 3
    %p338 = pnand %p336, %p337
    %p339 = pneg %p338
    // Predicated region
    $region61: #{resnet3_forward.1} parent=5 // pred_check
      _
    $region62: #{resnet3_forward.1} parent=5 // pred_check_branch
      %341 = sbr.rel (%p338) target = $region64
    $region63: #{resnet3_forward.1} parent=5 // pred_region
      %s342 = ssub.s32 %s17, 1
      %p343 = scmp.lt.s32.totalorder %s22, 1
      %s344 = scalar_select %p343, %s22, 1
      %s345 = smul.addr %s344, 2
      %s346 = smul.addr %s345, 8
      %s347 = scalar_lea.vmem %s0, %s346
      %p348 = pneg %p43
      %p349 = pneg %p40
      %p350 = pneg %p64
      %p351 = pneg %p61
      %p352 = pneg %p85
      %p353 = pneg %p82
      %p354 = pneg %p106
      %p355 = pneg %p103
      %p356 = pneg %p127
      %p357 = pneg %p124
      %p358 = pneg %p148
      %p359 = pneg %p145
      %p360 = pneg %p169
      %p361 = pneg %p166
      %p362 = pneg %p190
      %p363 = pneg %p187
      %p364 = pneg %p211
      %p365 = pneg %p208
      %p366 = pneg %p232
      %p367 = pneg %p229
      %p368 = pneg %p253
      %p369 = pneg %p250
      %p370 = pneg %p279
      %p371 = pneg %p276
      %p372 = scmp.lt.s32.totalorder %s22, 1
      %s373 = scalar_select %p372, %s22, 1
      %s374 = smul.addr %s373, 2
      %s375 = smul.addr %s374, 8
      %s376 = scalar_lea.vmem %s11, %s375
      %p377 = scmp.lt.s32.totalorder %s22, 1
      %s378 = scalar_select %p377, %s22, 1
      %s379 = smul.addr %s378, 2
      %s380 = smul.addr %s379, 8
      %s381 = scalar_lea.vmem %s0, %s380
      %p382 = scmp.lt.s32.totalorder %s22, 1
      %s383 = scalar_select %p382, %s22, 1
      %s384 = smul.addr %s383, 2
      %s385 = smul.addr %s384, 8
      %s386 = scalar_lea.vmem %s11, %s385
      %v390 = vld [vmem:[%s381] sm:$0xff]
      %v391 = vld [vmem:[%s381 + $0x8] sm:$0xff]
      %v392 = vld [vmem:[%s1] sm:$0xff]
      %v393 = vld [vmem:[%s1 + $0x8] sm:$0xff]
      %vm394 = vcmask 64512
      %v396 = vsel %vm394, %v392, 0
      %v399 = vsel %vm394, %v393, 0
      %401 = vmatprep.subr.mxu0 %v391
      %402 = vmatpush1.msra.mxu0 %v390
      %403 = vmatprep.subr.mxu0 0.0
      %404 = vmatpush1.msra.mxu0 0.0
      %405 = vmatprep.subr.mxu0 0.0
      %406 = vmatpush1.msra.mxu0 0.0
      %407 = vmatprep.subr.mxu0 0.0
      %408 = vmatpush1.msra.mxu0 0.0
      %409 = vmatprep.subr.mxu0 0.0
      %410 = vmatpush1.msra.mxu0 0.0
      %411 = vmatprep.subr.mxu0 0.0
      %412 = vmatpush1.msra.mxu0 0.0
      %413 = vmatprep.subr.mxu0 0.0
      %414 = vmatpush1.msra.mxu0 0.0
      %415 = vmatprep.subr.mxu0 0.0
      %416 = vmatpush1.msra.mxu0 0.0
      %417 = vmatprep.subr.mxu0 0.0
      %418 = vmatpush1.msra.mxu0 0.0
      %419 = vmatprep.subr.mxu0 0.0
      %420 = vmatpush1.msra.mxu0 0.0
      %421 = vmatprep.subr.mxu0 0.0
      %422 = vmatpush1.msra.mxu0 0.0
      %423 = vmatprep.subr.mxu0 0.0
      %424 = vmatpush1.msra.mxu0 0.0
      %425 = vmatprep.subr.mxu0 0.0
      %426 = vmatpush1.msra.mxu0 0.0
      %427 = vmatprep.subr.mxu0 0.0
      %428 = vmatpush1.msra.mxu0 0.0
      %429 = vmatprep.subr.mxu0 0.0
      %430 = vmatpush1.msra.mxu0 0.0
      %431 = vmatprep.subr.mxu0 0.0
      %432 = vmatpush1.msra.mxu0 0.0
      %433 = vmatprep.subr.mxu0 0.0
      %434 = vmatpush1.msra.mxu0 0.0
      %435 = vmatprep.subr.mxu0 0.0
      %436 = vmatpush1.msra.mxu0 0.0
      %437 = vmatprep.subr.mxu0 0.0
      %438 = vmatpush1.msra.mxu0 0.0
      %439 = vmatprep.subr.mxu0 0.0
      %440 = vmatpush1.msra.mxu0 0.0
      %441 = vmatprep.subr.mxu0 0.0
      %442 = vmatpush1.msra.mxu0 0.0
      %443 = vmatprep.subr.mxu0 0.0
      %444 = vmatpush1.msra.mxu0 0.0
      %445 = vmatprep.subr.mxu0 0.0
      %446 = vmatpush1.msra.mxu0 0.0
      %447 = vmatprep.subr.mxu0 0.0
      %448 = vmatpush1.msra.mxu0 0.0
      %449 = vmatprep.subr.mxu0 0.0
      %450 = vmatpush1.msra.mxu0 0.0
      %451 = vmatprep.subr.mxu0 0.0
      %452 = vmatpush1.msra.mxu0 0.0
      %453 = vmatprep.subr.mxu0 0.0
      %454 = vmatpush1.msra.mxu0 0.0
      %455 = vmatprep.subr.mxu0 0.0
      %456 = vmatpush1.msra.mxu0 0.0
      %457 = vmatprep.subr.mxu0 0.0
      %458 = vmatpush1.msra.mxu0 0.0
      %459 = vmatprep.subr.mxu0 0.0
      %460 = vmatpush1.msra.mxu0 0.0
      %461 = vmatprep.subr.mxu0 0.0
      %462 = vmatpush1.msra.mxu0 0.0
      %463 = vmatprep.subr.mxu0 0.0
      %464 = vmatpush1.msra.mxu0 0.0
      %465 = vmatprep.mubr.f32.mxu0 0.0
      %466 = vmatmul.mubr.f32.gmra.mrb[0].mxu0 %v396
      %v467 = vpop.f32.mrb[0].mxu0
      %v468 = vadd.f32 0.0, %v467
      %v469 = vpop.f32.mrb[0].mxu0
      %v470 = vadd.f32 0.0, %v469
      %471 = vmatprep.mubr.f32.mxu0 0.0
      %472 = vmatmul.mubr.f32.gmra.mrb[0].mxu0 %v399
      %v473 = vpop.f32.mrb[0].mxu0
      %v474 = vadd.f32 0.0, %v473
      %v475 = vpop.f32.mrb[0].mxu0
      %v476 = vadd.f32 0.0, %v475
      %477 = vdwg.mxu0
      %v478 = vld [vmem:[%s2] sm:$0xff]
      %v479 = vld [vmem:[%s2 + $0x8] sm:$0xff]
      %481 = vset.pattern.permute.xlu0 0
      %482 = vperm.xlu0 %481, %v478
      %v483 = vpop.permute.xlu0 %482
      %486 = vset.pattern.permute.xlu0 0
      %487 = vperm.xlu0 %486, %v479
      %v488 = vpop.permute.xlu0 %487
      %v490 = vmul.f32 %v468, %v483
      %v491 = vmul.f32 %v470, %v483
      %v492 = vmul.f32 %v474, %v488
      %v493 = vmul.f32 %v476, %v488
      %v494 = vld [vmem:[%s3] sm:$0xff]
      %v495 = vld [vmem:[%s3 + $0x8] sm:$0xff]
      %497 = vset.pattern.permute.xlu0 0
      %498 = vperm.xlu0 %497, %v494
      %v499 = vpop.permute.xlu0 %498
      %502 = vset.pattern.permute.xlu0 0
      %503 = vperm.xlu0 %502, %v495
      %v504 = vpop.permute.xlu0 %503
      %v506 = vadd.f32 %v490, %v499
      %v507 = vadd.f32 %v491, %v499
      %v508 = vadd.f32 %v492, %v504
      %v509 = vadd.f32 %v493, %v504
      %v510 = vmax.f32 %v506, 0.0
      %v511 = vmax.f32 %v507, 0.0
      %v512 = vmax.f32 %v508, 0.0
      %v513 = vmax.f32 %v509, 0.0
      %v514 = vpack.c.bf16 %v512, %v510
      %v515 = vpack.c.bf16 %v513, %v511
      %518 = vrot.lane.b32.xlu0 %v514, 34
      %v519 = vpop.permute.xlu0 %518
      %520 = vrot.lane.b32.xlu0 %v515, 34
      %v521 = vpop.permute.xlu0 %520
      %vm522 = vcmask 277504
      %v523 = vsel %vm522, %v519, %v521
      %vm525 = vcmask 277504
      %v528 = vsel %vm525, 0, %v519
      %v531 = vsel %vm525, %v521, 0
      %v533 = vlaneseq
      %v534 = vand.u32 %v533, 127
      %v535 = vadd.s32 %v534, 128
      %v536 = vadd.s32 %v534, 256
      %vm537 = vcmp.lt.s32.totalorder %v534, 0
      %v538 = vsub.s32 0, %v534
      %v539 = vsel %vm537, %v538, %v534
      %v540 = vshrl.u32 %v539, 4
      %v541 = vand.u32 %v539, 15
      %v542 = vsub.s32 0, %v541
      %v543 = vsel %vm537, %v542, %v541
      %vm544 = vcmp.lt.s32.totalorder %v535, 0
      %v545 = vsub.s32 0, %v535
      %v546 = vsel %vm544, %v545, %v535
      %v547 = vshrl.u32 %v546, 4
      %v548 = vand.u32 %v546, 15
      %v549 = vsub.s32 0, %v548
      %v550 = vsel %vm544, %v549, %v548
      %vm551 = vcmp.lt.s32.totalorder %v536, 0
      %v552 = vsub.s32 0, %v536
      %v553 = vsel %vm551, %v552, %v536
      %v554 = vshrl.u32 %v553, 4
      %v555 = vand.u32 %v553, 15
      %v556 = vsub.s32 0, %v555
      %v557 = vsel %vm551, %v556, %v555
      %vm558 = vcmp.ne.s32.totalorder %v543, 0
      %vm559 = vcmp.ne.s32.totalorder %v550, 0
      %vm560 = vcmp.ne.s32.totalorder %v557, 0
      %vm561 = vcmp.lt.s32.totalorder %v543, 0
      %vm562 = vcmp.lt.s32.totalorder %v550, 0
      %vm563 = vcmp.lt.s32.totalorder %v557, 0
      %vm564 = vmand %vm561, %vm558
      %vm565 = vmand %vm562, %vm559
      %vm566 = vmand %vm563, %vm560
      %v567 = vadd.s32 %v543, 16
      %v568 = vadd.s32 %v550, 16
      %v569 = vadd.s32 %v557, 16
      %v570 = vsel %vm564, %v567, %v543
      %v571 = vsel %vm565, %v568, %v550
      %v572 = vsel %vm566, %v569, %v557
      %v573 = vadd.s32 %v570, 4294967294
      %v574 = vadd.s32 %v571, 4294967294
      %v575 = vadd.s32 %v572, 4294967294
      %vm576 = vcmp.ge.s32.totalorder %v573, 0
      %vm577 = vcmp.ge.s32.totalorder %v574, 0
      %vm578 = vcmp.ge.s32.totalorder %v575, 0
      %vm579 = vcmp.lt.s32.totalorder %v573, 16
      %vm580 = vcmp.lt.s32.totalorder %v574, 16
      %vm581 = vcmp.lt.s32.totalorder %v575, 16
      %vm582 = vmand %vm576, %vm579
      %vm583 = vmand %vm577, %vm580
      %vm584 = vmand %vm578, %vm581
      %v585 = vsel %vm582, 1, 0
      %v586 = vsel %vm583, 1, 0
      %v587 = vsel %vm584, 1, 0
      %vm588 = vcmp.eq.s32.totalorder %v585, 1
      %vm589 = vcmp.eq.s32.totalorder %v586, 1
      %vm590 = vcmp.eq.s32.totalorder %v587, 1
      %vm591 = vmpackc.low %vm589, %vm588
      %vm592 = vmpackc.low %vm590, %vm590
      %v593 = vsel %vm591, 65537, 0
      %v594 = vsel %vm592, 65537, 0
      %v595 = vlaneseq
      %v596 = vshrl.u32 %v595, 7
      %v597 = vsub.s32 0, %v596
      %v598 = vrot.slane %v593, %v597
      %v599 = vlaneseq
      %v600 = vshrl.u32 %v599, 7
      %v601 = vsub.s32 4, %v600
      %v602 = vrot.slane %v593, %v601
      %v603 = vlaneseq
      %v604 = vshrl.u32 %v603, 7
      %v605 = vsub.s32 0, %v604
      %v606 = vrot.slane %v594, %v605
      %vm607 = vcmp.ne.s16.totalorder %v598, 0
      %vm608 = vcmp.ne.s16.totalorder %v602, 0
      %vm609 = vcmp.ne.s16.totalorder %v606, 0
      %v610 = vsel %vm607, %v528, 0
      %v611 = vsel %vm608, %v523, 0
      %v612 = vsel %vm609, %v531, 0
      %v613 = vadd.s32 %v570, 4294967295
      %v614 = vadd.s32 %v571, 4294967295
      %v615 = vadd.s32 %v572, 4294967295
      %vm616 = vcmp.ge.s32.totalorder %v613, 0
      %vm617 = vcmp.ge.s32.totalorder %v614, 0
      %vm618 = vcmp.ge.s32.totalorder %v615, 0
      %vm619 = vcmp.lt.s32.totalorder %v613, 16
      %vm620 = vcmp.lt.s32.totalorder %v614, 16
      %vm621 = vcmp.lt.s32.totalorder %v615, 16
      %vm622 = vmand %vm616, %vm619
      %vm623 = vmand %vm617, %vm620
      %vm624 = vmand %vm618, %vm621
      %v625 = vsel %vm622, 1, 0
      %v626 = vsel %vm623, 1, 0
      %v627 = vsel %vm624, 1, 0
      %vm628 = vcmp.eq.s32.totalorder %v625, 1
      %vm629 = vcmp.eq.s32.totalorder %v626, 1
      %vm630 = vcmp.eq.s32.totalorder %v627, 1
      %vm631 = vmpackc.low %vm629, %vm628
      %vm632 = vmpackc.low %vm630, %vm630
      %v633 = vsel %vm631, 65537, 0
      %v634 = vsel %vm632, 65537, 0
      %v635 = vlaneseq
      %v636 = vshrl.u32 %v635, 7
      %v637 = vsub.s32 0, %v636
      %v638 = vrot.slane %v633, %v637
      %v639 = vlaneseq
      %v640 = vshrl.u32 %v639, 7
      %v641 = vsub.s32 4, %v640
      %v642 = vrot.slane %v633, %v641
      %v643 = vlaneseq
      %v644 = vshrl.u32 %v643, 7
      %v645 = vsub.s32 0, %v644
      %v646 = vrot.slane %v634, %v645
      %647 = vrot.lane.b32.xlu0 %v638, 1
      %v648 = vpop.permute.xlu0 %647
      %649 = vrot.lane.b32.xlu0 %v642, 1
      %v650 = vpop.permute.xlu0 %649
      %651 = vrot.lane.b32.xlu0 %v646, 1
      %v652 = vpop.permute.xlu0 %651
      %vm653 = vcmask 7168
      %v654 = vsel %vm653, %v648, %v650
      %v655 = vsel %vm653, %v650, %v652
      %vm656 = vcmp.ne.s16.totalorder %v648, 0
      %vm657 = vcmp.ne.s16.totalorder %v654, 0
      %vm658 = vcmp.ne.s16.totalorder %v655, 0
      %v659 = vsel %vm656, %v528, 0
      %v660 = vsel %vm657, %v523, 0
      %v661 = vsel %vm658, %v531, 0
      %v662 = vadd.s32 %v570, 1
      %v663 = vadd.s32 %v571, 1
      %v664 = vadd.s32 %v572, 1
      %vm665 = vcmp.ge.s32.totalorder %v662, 0
      %vm666 = vcmp.ge.s32.totalorder %v663, 0
      %vm667 = vcmp.ge.s32.totalorder %v664, 0
      %vm668 = vcmp.lt.s32.totalorder %v662, 16
      %vm669 = vcmp.lt.s32.totalorder %v663, 16
      %vm670 = vcmp.lt.s32.totalorder %v664, 16
      %vm671 = vmand %vm665, %vm668
      %vm672 = vmand %vm666, %vm669
      %vm673 = vmand %vm667, %vm670
      %v674 = vsel %vm671, 1, 0
      %v675 = vsel %vm672, 1, 0
      %v676 = vsel %vm673, 1, 0
      %vm677 = vcmp.eq.s32.totalorder %v674, 1
      %vm678 = vcmp.eq.s32.totalorder %v675, 1
      %vm679 = vcmp.eq.s32.totalorder %v676, 1
      %vm680 = vmpackc.low %vm678, %vm677
      %vm681 = vmpackc.low %vm679, %vm679
      %v682 = vsel %vm680, 65537, 0
      %v683 = vsel %vm681, 65537, 0
      %v684 = vlaneseq
      %v685 = vshrl.u32 %v684, 7
      %v686 = vsub.s32 0, %v685
      %v687 = vrot.slane %v682, %v686
      %v688 = vlaneseq
      %v689 = vshrl.u32 %v688, 7
      %v690 = vsub.s32 4, %v689
      %v691 = vrot.slane %v682, %v690
      %v692 = vlaneseq
      %v693 = vshrl.u32 %v692, 7
      %v694 = vsub.s32 0, %v693
      %v695 = vrot.slane %v683, %v694
      %696 = vrot.lane.b32.xlu0 %v687, 3
      %v697 = vpop.permute.xlu0 %696
      %698 = vrot.lane.b32.xlu0 %v691, 3
      %v699 = vpop.permute.xlu0 %698
      %700 = vrot.lane.b32.xlu0 %v695, 3
      %v701 = vpop.permute.xlu0 %700
      %vm702 = vcmask 23552
      %v703 = vsel %vm702, %v697, %v699
      %v704 = vsel %vm702, %v699, %v701
      %vm705 = vcmp.ne.s16.totalorder %v697, 0
      %vm706 = vcmp.ne.s16.totalorder %v703, 0
      %vm707 = vcmp.ne.s16.totalorder %v704, 0
      %v708 = vsel %vm705, %v528, 0
      %v709 = vsel %vm706, %v523, 0
      %v710 = vsel %vm707, %v531, 0
      %v711 = vadd.s32 %v570, 2
      %v712 = vadd.s32 %v571, 2
      %v713 = vadd.s32 %v572, 2
      %vm714 = vcmp.ge.s32.totalorder %v711, 0
      %vm715 = vcmp.ge.s32.totalorder %v712, 0
      %vm716 = vcmp.ge.s32.totalorder %v713, 0
      %vm717 = vcmp.lt.s32.totalorder %v711, 16
      %vm718 = vcmp.lt.s32.totalorder %v712, 16
      %vm719 = vcmp.lt.s32.totalorder %v713, 16
      %vm720 = vmand %vm714, %vm717
      %vm721 = vmand %vm715, %vm718
      %vm722 = vmand %vm716, %vm719
      %v723 = vsel %vm720, 1, 0
      %v724 = vsel %vm721, 1, 0
      %v725 = vsel %vm722, 1, 0
      %vm726 = vcmp.eq.s32.totalorder %v723, 1
      %vm727 = vcmp.eq.s32.totalorder %v724, 1
      %vm728 = vcmp.eq.s32.totalorder %v725, 1
      %vm729 = vmpackc.low %vm727, %vm726
      %vm730 = vmpackc.low %vm728, %vm728
      %v731 = vsel %vm729, 65537, 0
      %v732 = vsel %vm730, 65537, 0
      %v733 = vlaneseq
      %v734 = vshrl.u32 %v733, 7
      %v735 = vsub.s32 0, %v734
      %v736 = vrot.slane %v731, %v735
      %v737 = vlaneseq
      %v738 = vshrl.u32 %v737, 7
      %v739 = vsub.s32 4, %v738
      %v740 = vrot.slane %v731, %v739
      %v741 = vlaneseq
      %v742 = vshrl.u32 %v741, 7
      %v743 = vsub.s32 0, %v742
      %v744 = vrot.slane %v732, %v743
      %745 = vrot.lane.b32.xlu0 %v736, 4
      %v746 = vpop.permute.xlu0 %745
      %747 = vrot.lane.b32.xlu0 %v740, 4
      %v748 = vpop.permute.xlu0 %747
      %749 = vrot.lane.b32.xlu0 %v744, 4
      %v750 = vpop.permute.xlu0 %749
      %vm751 = vcmask 31744
      %v752 = vsel %vm751, %v746, %v748
      %v753 = vsel %vm751, %v748, %v750
      %vm754 = vcmp.ne.s16.totalorder %v746, 0
      %vm755 = vcmp.ne.s16.totalorder %v752, 0
      %vm756 = vcmp.ne.s16.totalorder %v753, 0
      %v757 = vsel %vm754, %v528, 0
      %v758 = vsel %vm755, %v523, 0
      %v759 = vsel %vm756, %v531, 0
      %762 = vrot.lane.b32.xlu0 %v528, 127
      %v763 = vpop.permute.xlu0 %762
      %764 = vrot.lane.b32.xlu0 %v523, 127
      %v765 = vpop.permute.xlu0 %764
      %766 = vrot.lane.b32.xlu0 %v531, 127
      %v767 = vpop.permute.xlu0 %766
      %vm768 = vcmask 1039360
      %v769 = vsel %vm768, %v763, %v765
      %v770 = vsel %vm768, %v765, %v767
      %774 = vrot.lane.b32.xlu0 %v708, 126
      %v775 = vpop.permute.xlu0 %774
      %776 = vrot.lane.b32.xlu0 %v709, 126
      %v777 = vpop.permute.xlu0 %776
      %778 = vrot.lane.b32.xlu0 %v710, 126
      %v779 = vpop.permute.xlu0 %778
      %vm780 = vcmask 1031168
      %v781 = vsel %vm780, %v775, %v777
      %v782 = vsel %vm780, %v777, %v779
      %786 = vrot.lane.b32.xlu0 %v659, 112
      %v787 = vpop.permute.xlu0 %786
      %788 = vrot.lane.b32.xlu0 %v660, 112
      %v789 = vpop.permute.xlu0 %788
      %790 = vrot.lane.b32.xlu0 %v661, 112
      %v791 = vpop.permute.xlu0 %790
      %vm792 = vcmask 916480
      %v793 = vsel %vm792, %v787, %v789
      %v794 = vsel %vm792, %v789, %v791
      %795 = vrot.lane.b32.xlu0 %v528, 111
      %v796 = vpop.permute.xlu0 %795
      %797 = vrot.lane.b32.xlu0 %v523, 111
      %v798 = vpop.permute.xlu0 %797
      %799 = vrot.lane.b32.xlu0 %v531, 111
      %v800 = vpop.permute.xlu0 %799
      %vm801 = vcmask 908288
      %v802 = vsel %vm801, %v796, %v798
      %v803 = vsel %vm801, %v798, %v800
      %804 = vrot.lane.b32.xlu0 %v708, 110
      %v805 = vpop.permute.xlu0 %804
      %806 = vrot.lane.b32.xlu0 %v709, 110
      %v807 = vpop.permute.xlu0 %806
      %808 = vrot.lane.b32.xlu0 %v710, 110
      %v809 = vpop.permute.xlu0 %808
      %vm810 = vcmask 900096
      %v811 = vsel %vm810, %v805, %v807
      %v812 = vsel %vm810, %v807, %v809
      %813 = vrot.lane.b32.xlu0 %v659, 96
      %v814 = vpop.permute.xlu0 %813
      %815 = vrot.lane.b32.xlu0 %v660, 96
      %v816 = vpop.permute.xlu0 %815
      %817 = vrot.lane.b32.xlu0 %v661, 96
      %v818 = vpop.permute.xlu0 %817
      %vm819 = vcmask 785408
      %v820 = vsel %vm819, %v814, %v816
      %v821 = vsel %vm819, %v816, %v818
      %822 = vrot.lane.b32.xlu0 %v528, 95
      %v823 = vpop.permute.xlu0 %822
      %824 = vrot.lane.b32.xlu0 %v523, 95
      %v825 = vpop.permute.xlu0 %824
      %826 = vrot.lane.b32.xlu0 %v531, 95
      %v827 = vpop.permute.xlu0 %826
      %vm828 = vcmask 777216
      %v829 = vsel %vm828, %v823, %v825
      %v830 = vsel %vm828, %v825, %v827
      %831 = vrot.lane.b32.xlu0 %v708, 94
      %v832 = vpop.permute.xlu0 %831
      %833 = vrot.lane.b32.xlu0 %v709, 94
      %v834 = vpop.permute.xlu0 %833
      %835 = vrot.lane.b32.xlu0 %v710, 94
      %v836 = vpop.permute.xlu0 %835
      %vm837 = vcmask 769024
      %v838 = vsel %vm837, %v832, %v834
      %v839 = vsel %vm837, %v834, %v836
      %v840 = vld [vmem:[%s4] sm:$0xff]
      %v842 = vunpack.c.l.b16 %v840
      %v843 = vunpack.c.h.b16 %v840
      %v844 = vpack.c.b16 %v842, %v842
      %v845 = vpack.c.b16 %v843, %v843
      %847 = vrot.lane.b32.xlu0 %v659, 111
      %v848 = vpop.permute.xlu0 %847
      %849 = vrot.lane.b32.xlu0 %v660, 111
      %v850 = vpop.permute.xlu0 %849
      %851 = vrot.lane.b32.xlu0 %v661, 111
      %v852 = vpop.permute.xlu0 %851
      %853 = vrot.lane.b32.xlu0 %v769, 111
      %v854 = vpop.permute.xlu0 %853
      %855 = vrot.lane.b32.xlu0 %v770, 111
      %v856 = vpop.permute.xlu0 %855
      %857 = vrot.lane.b32.xlu0 %v767, 111
      %v858 = vpop.permute.xlu0 %857
      %859 = vrot.lane.b32.xlu0 %v781, 111
      %v860 = vpop.permute.xlu0 %859
      %861 = vrot.lane.b32.xlu0 %v782, 111
      %v862 = vpop.permute.xlu0 %861
      %863 = vrot.lane.b32.xlu0 %v779, 111
      %v864 = vpop.permute.xlu0 %863
      %865 = vrot.lane.b32.xlu0 %v793, 111
      %v866 = vpop.permute.xlu0 %865
      %867 = vrot.lane.b32.xlu0 %v794, 111
      %v868 = vpop.permute.xlu0 %867
      %869 = vrot.lane.b32.xlu0 %v791, 111
      %v870 = vpop.permute.xlu0 %869
      %871 = vrot.lane.b32.xlu0 %v802, 111
      %v872 = vpop.permute.xlu0 %871
      %873 = vrot.lane.b32.xlu0 %v803, 111
      %v874 = vpop.permute.xlu0 %873
      %875 = vrot.lane.b32.xlu0 %v800, 111
      %v876 = vpop.permute.xlu0 %875
      %877 = vrot.lane.b32.xlu0 %v811, 111
      %v878 = vpop.permute.xlu0 %877
      %879 = vrot.lane.b32.xlu0 %v812, 111
      %v880 = vpop.permute.xlu0 %879
      %881 = vrot.lane.b32.xlu0 %v809, 111
      %v882 = vpop.permute.xlu0 %881
      %883 = vrot.lane.b32.xlu0 %v820, 111
      %v884 = vpop.permute.xlu0 %883
      %885 = vrot.lane.b32.xlu0 %v821, 111
      %v886 = vpop.permute.xlu0 %885
      %887 = vrot.lane.b32.xlu0 %v818, 111
      %v888 = vpop.permute.xlu0 %887
      %889 = vrot.lane.b32.xlu0 %v829, 111
      %v890 = vpop.permute.xlu0 %889
      %891 = vrot.lane.b32.xlu0 %v830, 111
      %v892 = vpop.permute.xlu0 %891
      %893 = vrot.lane.b32.xlu0 %v827, 111
      %v894 = vpop.permute.xlu0 %893
      %895 = vrot.lane.b32.xlu0 %v838, 111
      %v896 = vpop.permute.xlu0 %895
      %897 = vrot.lane.b32.xlu0 %v839, 111
      %v898 = vpop.permute.xlu0 %897
      %899 = vrot.lane.b32.xlu0 %v836, 111
      %v900 = vpop.permute.xlu0 %899
      %v901 = vsel %vm801, %v848, %v850
      %v902 = vsel %vm801, %v850, %v852
      %v903 = vsel %vm801, %v854, %v856
      %v904 = vsel %vm801, %v856, %v858
      %v905 = vsel %vm801, %v860, %v862
      %v906 = vsel %vm801, %v862, %v864
      %v907 = vsel %vm801, %v866, %v868
      %v908 = vsel %vm801, %v868, %v870
      %v909 = vsel %vm801, %v872, %v874
      %v910 = vsel %vm801, %v874, %v876
      %v911 = vsel %vm801, %v878, %v880
      %v912 = vsel %vm801, %v880, %v882
      %v913 = vsel %vm801, %v884, %v886
      %v914 = vsel %vm801, %v886, %v888
      %v915 = vsel %vm801, %v890, %v892
      %v916 = vsel %vm801, %v892, %v894
      %v917 = vsel %vm801, %v896, %v898
      %v918 = vsel %vm801, %v898, %v900
      %vm937 = vcmask 130048
      %v939 = vsel %vm937, %v845, 0
      %941 = vmatprep.subr.bf16.mxu0 %v902
      %942 = vmatpush1.bf16.msra.mxu0 %v901
      %943 = vmatprep.subr.bf16.mxu0 %v904
      %944 = vmatpush1.bf16.msra.mxu0 %v903
      %945 = vmatprep.subr.bf16.mxu0 %v906
      %946 = vmatpush1.bf16.msra.mxu0 %v905
      %947 = vmatprep.subr.bf16.mxu0 %v908
      %948 = vmatpush1.bf16.msra.mxu0 %v907
      %949 = vmatprep.subr.bf16.mxu0 %v910
      %950 = vmatpush1.bf16.msra.mxu0 %v909
      %951 = vmatprep.subr.bf16.mxu0 %v912
      %952 = vmatpush1.bf16.msra.mxu0 %v911
      %953 = vmatprep.subr.bf16.mxu0 %v914
      %954 = vmatpush1.bf16.msra.mxu0 %v913
      %955 = vmatprep.subr.bf16.mxu0 %v916
      %956 = vmatpush1.bf16.msra.mxu0 %v915
      %957 = vmatprep.subr.bf16.mxu0 %v918
      %958 = vmatpush1.bf16.msra.mxu0 %v917
      %959 = vmatprep.subr.bf16.mxu0 0
      %960 = vmatpush1.bf16.msra.mxu0 0
      %961 = vmatprep.subr.bf16.mxu0 0
      %962 = vmatpush1.bf16.msra.mxu0 0
      %963 = vmatprep.subr.bf16.mxu0 0
      %964 = vmatpush1.bf16.msra.mxu0 0
      %965 = vmatprep.subr.bf16.mxu0 0
      %966 = vmatpush1.bf16.msra.mxu0 0
      %967 = vmatprep.subr.bf16.mxu0 0
      %968 = vmatpush1.bf16.msra.mxu0 0
      %969 = vmatprep.subr.bf16.mxu0 0
      %970 = vmatpush1.bf16.msra.mxu0 0
      %971 = vmatprep.subr.bf16.mxu0 0
      %972 = vmatpush1.bf16.msra.mxu0 0
      %973 = vmatprep.mubr.bf16.mxu0 %v939
      %974 = vmatmul.mubr.bf16.gmra.mrb[0].mxu0 %v844
      %v975 = vpop.f32.mrb[0].mxu0
      %v976 = vadd.f32 0.0, %v975
      %v977 = vpop.f32.mrb[0].mxu0
      %v978 = vadd.f32 0.0, %v977
      %v979 = vpop.f32.mrb[0].mxu0
      %v980 = vpop.f32.mrb[0].mxu0
      %981 = vdwg.mxu0
      %982 = vrot.lane.b32.xlu0 %v528, 126
      %v983 = vpop.permute.xlu0 %982
      %984 = vrot.lane.b32.xlu0 %v523, 126
      %v985 = vpop.permute.xlu0 %984
      %986 = vrot.lane.b32.xlu0 %v531, 126
      %v987 = vpop.permute.xlu0 %986
      %v988 = vsel %vm780, %v983, %v985
      %v989 = vsel %vm780, %v985, %v987
      %995 = vrot.lane.b32.xlu0 %v757, 124
      %v996 = vpop.permute.xlu0 %995
      %997 = vrot.lane.b32.xlu0 %v758, 124
      %v998 = vpop.permute.xlu0 %997
      %999 = vrot.lane.b32.xlu0 %v759, 124
      %v1000 = vpop.permute.xlu0 %999
      %vm1001 = vcmask 1014784
      %v1002 = vsel %vm1001, %v996, %v998
      %v1003 = vsel %vm1001, %v998, %v1000
      %1009 = vrot.lane.b32.xlu0 %v610, 96
      %v1010 = vpop.permute.xlu0 %1009
      %1011 = vrot.lane.b32.xlu0 %v611, 96
      %v1012 = vpop.permute.xlu0 %1011
      %1013 = vrot.lane.b32.xlu0 %v612, 96
      %v1014 = vpop.permute.xlu0 %1013
      %v1015 = vsel %vm819, %v1010, %v1012
      %v1016 = vsel %vm819, %v1012, %v1014
      %1019 = vrot.lane.b32.xlu0 %v528, 94
      %v1020 = vpop.permute.xlu0 %1019
      %1021 = vrot.lane.b32.xlu0 %v523, 94
      %v1022 = vpop.permute.xlu0 %1021
      %1023 = vrot.lane.b32.xlu0 %v531, 94
      %v1024 = vpop.permute.xlu0 %1023
      %v1025 = vsel %vm837, %v1020, %v1022
      %v1026 = vsel %vm837, %v1022, %v1024
      %1029 = vrot.lane.b32.xlu0 %v757, 92
      %v1030 = vpop.permute.xlu0 %1029
      %1031 = vrot.lane.b32.xlu0 %v758, 92
      %v1032 = vpop.permute.xlu0 %1031
      %1033 = vrot.lane.b32.xlu0 %v759, 92
      %v1034 = vpop.permute.xlu0 %1033
      %vm1035 = vcmask 752640
      %v1036 = vsel %vm1035, %v1030, %v1032
      %v1037 = vsel %vm1035, %v1032, %v1034
      %1040 = vrot.lane.b32.xlu0 %v610, 64
      %v1041 = vpop.permute.xlu0 %1040
      %1042 = vrot.lane.b32.xlu0 %v611, 64
      %v1043 = vpop.permute.xlu0 %1042
      %1044 = vrot.lane.b32.xlu0 %v612, 64
      %v1045 = vpop.permute.xlu0 %1044
      %vm1046 = vcmask 523264
      %v1047 = vsel %vm1046, %v1041, %v1043
      %v1048 = vsel %vm1046, %v1043, %v1045
      %1051 = vrot.lane.b32.xlu0 %v528, 62
      %v1052 = vpop.permute.xlu0 %1051
      %1053 = vrot.lane.b32.xlu0 %v523, 62
      %v1054 = vpop.permute.xlu0 %1053
      %1055 = vrot.lane.b32.xlu0 %v531, 62
      %v1056 = vpop.permute.xlu0 %1055
      %vm1057 = vcmask 506880
      %v1058 = vsel %vm1057, %v1052, %v1054
      %v1059 = vsel %vm1057, %v1054, %v1056
      %1062 = vrot.lane.b32.xlu0 %v757, 60
      %v1063 = vpop.permute.xlu0 %1062
      %1064 = vrot.lane.b32.xlu0 %v758, 60
      %v1065 = vpop.permute.xlu0 %1064
      %1066 = vrot.lane.b32.xlu0 %v759, 60
      %v1067 = vpop.permute.xlu0 %1066
      %vm1068 = vcmask 490496
      %v1069 = vsel %vm1068, %v1063, %v1065
      %v1070 = vsel %vm1068, %v1065, %v1067
      %v1073 = vld [vmem:[%s5] sm:$0xff]
      %v1075 = vunpack.c.l.b16 %v1073
      %v1076 = vunpack.c.h.b16 %v1073
      %v1077 = vpack.c.b16 %v1075, %v1075
      %v1078 = vpack.c.b16 %v1076, %v1076
      %v1081 = vsel %vm937, %v1078, 0
      %1083 = vmatprep.subr.bf16.mxu0 %v611
      %1084 = vmatpush1.bf16.msra.mxu0 %v610
      %1085 = vmatprep.subr.bf16.mxu0 %v989
      %1086 = vmatpush1.bf16.msra.mxu0 %v988
      %1087 = vmatprep.subr.bf16.mxu0 %v1003
      %1088 = vmatpush1.bf16.msra.mxu0 %v1002
      %1089 = vmatprep.subr.bf16.mxu0 %v1016
      %1090 = vmatpush1.bf16.msra.mxu0 %v1015
      %1091 = vmatprep.subr.bf16.mxu0 %v1026
      %1092 = vmatpush1.bf16.msra.mxu0 %v1025
      %1093 = vmatprep.subr.bf16.mxu0 %v1037
      %1094 = vmatpush1.bf16.msra.mxu0 %v1036
      %1095 = vmatprep.subr.bf16.mxu0 %v1048
      %1096 = vmatpush1.bf16.msra.mxu0 %v1047
      %1097 = vmatprep.subr.bf16.mxu0 %v1059
      %1098 = vmatpush1.bf16.msra.mxu0 %v1058
      %1099 = vmatprep.subr.bf16.mxu0 %v1070
      %1100 = vmatpush1.bf16.msra.mxu0 %v1069
      %1101 = vmatprep.subr.bf16.mxu0 0
      %1102 = vmatpush1.bf16.msra.mxu0 0
      %1103 = vmatprep.subr.bf16.mxu0 0
      %1104 = vmatpush1.bf16.msra.mxu0 0
      %1105 = vmatprep.subr.bf16.mxu0 0
      %1106 = vmatpush1.bf16.msra.mxu0 0
      %1107 = vmatprep.subr.bf16.mxu0 0
      %1108 = vmatpush1.bf16.msra.mxu0 0
      %1109 = vmatprep.subr.bf16.mxu0 0
      %1110 = vmatpush1.bf16.msra.mxu0 0
      %1111 = vmatprep.subr.bf16.mxu0 0
      %1112 = vmatpush1.bf16.msra.mxu0 0
      %1113 = vmatprep.subr.bf16.mxu0 0
      %1114 = vmatpush1.bf16.msra.mxu0 0
      %1115 = vmatprep.mubr.bf16.mxu0 %v1081
      %1116 = vmatmul.mubr.bf16.gmra.mrb[0].mxu0 %v1077
      %v1117 = vpop.f32.mrb[0].mxu0
      %v1118 = vadd.f32 0.0, %v1117
      %v1119 = vpop.f32.mrb[0].mxu0
      %v1120 = vadd.f32 0.0, %v1119
      %v1121 = vpop.f32.mrb[0].mxu0
      %v1122 = vpop.f32.mrb[0].mxu0
      %1123 = vdwg.mxu0
      %v1124 = vld [vmem:[%s6] sm:$0xff]
      %v1125 = vld [vmem:[%s6 + $0x8] sm:$0xff]
      %1127 = vset.pattern.permute.xlu0 0
      %1128 = vperm.xlu0 %1127, %v1124
      %v1129 = vpop.permute.xlu0 %1128
      %1132 = vset.pattern.permute.xlu0 0
      %1133 = vperm.xlu0 %1132, %v1125
      %v1134 = vpop.permute.xlu0 %1133
      %v1136 = vmul.f32 %v976, %v1129
      %v1137 = vmul.f32 %v978, %v1129
      %v1138 = vmul.f32 %v1118, %v1134
      %v1139 = vmul.f32 %v1120, %v1134
      %v1140 = vld [vmem:[%s7] sm:$0xff]
      %v1141 = vld [vmem:[%s7 + $0x8] sm:$0xff]
      %1143 = vset.pattern.permute.xlu0 0
      %1144 = vperm.xlu0 %1143, %v1140
      %v1145 = vpop.permute.xlu0 %1144
      %1148 = vset.pattern.permute.xlu0 0
      %1149 = vperm.xlu0 %1148, %v1141
      %v1150 = vpop.permute.xlu0 %1149
      %v1152 = vadd.f32 %v1136, %v1145
      %v1153 = vadd.f32 %v1137, %v1145
      %v1154 = vadd.f32 %v1138, %v1150
      %v1155 = vadd.f32 %v1139, %v1150
      %v1156 = vmax.f32 %v1152, 0.0
      %v1157 = vmax.f32 %v1153, 0.0
      %v1158 = vmax.f32 %v1154, 0.0
      %v1159 = vmax.f32 %v1155, 0.0
      %v1160 = vld [vmem:[%s8] sm:$0xff]
      %v1162 = vsel %vm937, %v1160, 0
      %1164 = vmatprep.subr.mxu0 %v1157
      %1165 = vmatpush1.msra.mxu0 %v1156
      %1166 = vmatprep.subr.mxu0 %v1159
      %1167 = vmatpush1.msra.mxu0 %v1158
      %1168 = vmatprep.subr.mxu0 0.0
      %1169 = vmatpush1.msra.mxu0 0.0
      %1170 = vmatprep.subr.mxu0 0.0
      %1171 = vmatpush1.msra.mxu0 0.0
      %1172 = vmatprep.subr.mxu0 0.0
      %1173 = vmatpush1.msra.mxu0 0.0
      %1174 = vmatprep.subr.mxu0 0.0
      %1175 = vmatpush1.msra.mxu0 0.0
      %1176 = vmatprep.subr.mxu0 0.0
      %1177 = vmatpush1.msra.mxu0 0.0
      %1178 = vmatprep.subr.mxu0 0.0
      %1179 = vmatpush1.msra.mxu0 0.0
      %1180 = vmatprep.subr.mxu0 0.0
      %1181 = vmatpush1.msra.mxu0 0.0
      %1182 = vmatprep.subr.mxu0 0.0
      %1183 = vmatpush1.msra.mxu0 0.0
      %1184 = vmatprep.subr.mxu0 0.0
      %1185 = vmatpush1.msra.mxu0 0.0
      %1186 = vmatprep.subr.mxu0 0.0
      %1187 = vmatpush1.msra.mxu0 0.0
      %1188 = vmatprep.subr.mxu0 0.0
      %1189 = vmatpush1.msra.mxu0 0.0
      %1190 = vmatprep.subr.mxu0 0.0
      %1191 = vmatpush1.msra.mxu0 0.0
      %1192 = vmatprep.subr.mxu0 0.0
      %1193 = vmatpush1.msra.mxu0 0.0
      %1194 = vmatprep.subr.mxu0 0.0
      %1195 = vmatpush1.msra.mxu0 0.0
      %1196 = vmatprep.subr.mxu0 0.0
      %1197 = vmatpush1.msra.mxu0 0.0
      %1198 = vmatprep.subr.mxu0 0.0
      %1199 = vmatpush1.msra.mxu0 0.0
      %1200 = vmatprep.subr.mxu0 0.0
      %1201 = vmatpush1.msra.mxu0 0.0
      %1202 = vmatprep.subr.mxu0 0.0
      %1203 = vmatpush1.msra.mxu0 0.0
      %1204 = vmatprep.subr.mxu0 0.0
      %1205 = vmatpush1.msra.mxu0 0.0
      %1206 = vmatprep.subr.mxu0 0.0
      %1207 = vmatpush1.msra.mxu0 0.0
      %1208 = vmatprep.subr.mxu0 0.0
      %1209 = vmatpush1.msra.mxu0 0.0
      %1210 = vmatprep.subr.mxu0 0.0
      %1211 = vmatpush1.msra.mxu0 0.0
      %1212 = vmatprep.subr.mxu0 0.0
      %1213 = vmatpush1.msra.mxu0 0.0
      %1214 = vmatprep.subr.mxu0 0.0
      %1215 = vmatpush1.msra.mxu0 0.0
      %1216 = vmatprep.subr.mxu0 0.0
      %1217 = vmatpush1.msra.mxu0 0.0
      %1218 = vmatprep.subr.mxu0 0.0
      %1219 = vmatpush1.msra.mxu0 0.0
      %1220 = vmatprep.subr.mxu0 0.0
      %1221 = vmatpush1.msra.mxu0 0.0
      %1222 = vmatprep.subr.mxu0 0.0
      %1223 = vmatpush1.msra.mxu0 0.0
      %1224 = vmatprep.subr.mxu0 0.0
      %1225 = vmatpush1.msra.mxu0 0.0
      %1226 = vmatprep.subr.mxu0 0.0
      %1227 = vmatpush1.msra.mxu0 0.0
      %1228 = vmatprep.mubr.f32.mxu0 0.0
      %1229 = vmatmul.mubr.f32.gmra.mrb[0].mxu0 %v1162
      %v1230 = vpop.f32.mrb[0].mxu0
      %v1231 = vadd.f32 0.0, %v1230
      %v1232 = vpop.f32.mrb[0].mxu0
      %v1233 = vadd.f32 0.0, %v1232
      %1234 = vdwg.mxu0
      %v1235 = vld [vmem:[%s9] sm:$0xff]
      %1237 = vset.pattern.permute.xlu0 0
      %1238 = vperm.xlu0 %1237, %v1235
      %v1239 = vpop.permute.xlu0 %1238
      %v1241 = vmul.f32 %v1231, %v1239
      %v1242 = vmul.f32 %v1233, %v1239
      %v1243 = vld [vmem:[%s10] sm:$0xff]
      %1245 = vset.pattern.permute.xlu0 0
      %1246 = vperm.xlu0 %1245, %v1243
      %v1247 = vpop.permute.xlu0 %1246
      %v1249 = vadd.f32 %v1241, %v1247
      %v1250 = vadd.f32 %v1242, %v1247
      %v1251 = vmax.f32 %v1249, 0.0
      %v1252 = vmax.f32 %v1250, 0.0
      %v1253 = vadd.f32 %v1251, %v390
      %v1254 = vadd.f32 %v1252, %v391
      %v1255 = vmax.f32 %v1253, 0.0
      %v1256 = vmax.f32 %v1254, 0.0
      %1257 = vst [vmem:[%s386] sm:$0xff] %v1255
      %1258 = vst [vmem:[%s386 + $0x8] sm:$0xff] %v1256
      %p1259 = scmp.lt.s32.totalorder %s22, 1
      %s1260 = scalar_select %p1259, %s22, 1
      %s1261 = smul.addr %s1260, 2
      %s1262 = smul.addr %s1261, 8
      %s1263 = scalar_lea.vmem %s11, %s1262
      // Predicated region
      $region65: #{resnet3_forward.1} parent=63 // pred_check
        %p1264 = pneg %p276
      $region66: #{resnet3_forward.1} parent=63 // pred_check_branch
        %1266 = sbr.rel (%p1264) target = $region68
      $region67: #{resnet3_forward.1} parent=63 // pred_region
        _
      $region68: #{resnet3_forward.1} parent=63 // pred_fallthru
        _
    $region64: #{resnet3_forward.1} parent=5 // pred_fallthru
      _
    %p1267 = scmp.le.s32.totalorder 2, %s17
    // Predicated region
    $region69: #{resnet3_forward.1} parent=5 // pred_check
      %p1268 = pneg %p1267
    $region70: #{resnet3_forward.1} parent=5 // pred_check_branch
      %1270 = sbr.rel (%p1268) target = $region72
    $region71: #{resnet3_forward.1} parent=5 // pred_region
      %s1271 = ssub.s32 %s17, 2
      // Predicated region
      $region73: #{resnet3_forward.1} parent=71 // pred_check
        %p1272 = pneg %p282
      $region74: #{resnet3_forward.1} parent=71 // pred_check_branch
        %1274 = sbr.rel (%p1272) target = $region76
      $region75: #{resnet3_forward.1} parent=71 // pred_region
        %p1275 = scmp.lt.s32.totalorder %s23, 1
        %s1276 = scalar_select %p1275, %s23, 1
        %s1277 = smul.addr %s1276, 2
        %s1278 = smul.addr %s1277, 8
        %s1279 = scalar_lea.vmem %s11, %s1278
      $region76: #{resnet3_forward.1} parent=71 // pred_fallthru
        _
    $region72: #{resnet3_forward.1} parent=5 // pred_fallthru
      _
  $region6: #{resnet3_forward.1} parent=0 // loop_footer
    %s21 = sadd.s32 1, %s17
  $region7: #{resnet3_forward.1} parent=0 // loop_footer_branch
    %16 = sbr.rel target = $region3
  $region8: #{resnet3_forward.1} parent=0 // loop_exit
    _

</llo_original>
